<compile_context>
chip_gen: v5e
topology: v5e:2x2
jax: 0.10.0
libtpu: 0.0.40
codegen_flags: <defaults>
</compile_context>

<pallas_src>
import jax
import jax.numpy as jnp
from jax.experimental import pallas as pl
from jax.experimental.pallas import tpu as pltpu


def _pagnn_hop_kernel(adj_ref, smask_ref, asrc_ref, adst_ref, act_ref,
                      xw_ref, state_ref, nf_ref, bias_ref, wl_ref, bl_ref,
                      out_ref):
    """One broadcast hop for one tile of TM target rows."""
    TM, N = adj_ref.shape
    D = nf_ref.shape[1]
    f32 = jnp.float32
    row_off = pl.program_id(0) * TM

    # ---- hop edge mask: edge s->t exists iff adj[t,s] and s is an active source
    adj = adj_ref[...]                                   # [TM, N] bf16 0/1
    edge = jnp.logical_and(adj > 0.5, smask_ref[...] > 0.5)      # [TM, N] bool

    # self-loops (GATConv adds them unconditionally): one iota-difference compare
    cols = jax.lax.broadcasted_iota(jnp.int32, (TM, N), 1)
    rows = jax.lax.broadcasted_iota(jnp.int32, (TM, N), 0)
    att_mask = jnp.logical_or(edge, (cols - rows) == row_off)

    # ---- GeniePath breadth: GAT attention (1 head, LeakyReLU 0.2) + tanh ----
    # e[t, s] = a_dst . (W x_t) + a_src . (W x_s)   (alphas precomputed O(N*D))
    e = adst_ref[...] + asrc_ref[...]                    # [TM,1] + [1,N]
    e = jnp.where(e > 0.0, e, 0.2 * e)                   # LeakyReLU(0.2)
    logits = jnp.where(att_mask, e, -1e30)
    m = jnp.max(logits, axis=1, keepdims=True)
    p = jnp.exp(logits - m)                              # unnormalized weights
    denom = jnp.sum(p, axis=1, keepdims=True)
    # bf16 MXU inputs, f32 accumulate; normalize AFTER the matmul (flash style)
    acc = jnp.dot(p.astype(jnp.bfloat16), xw_ref[...],
                  preferred_element_type=f32)            # [TM, D]
    gat = acc * pl.reciprocal(denom, approx=True) + bias_ref[...]
    b = jnp.tanh(gat)

    # ---- GeniePath depth: single-step LSTM, fused gate matmul -------------
    x = state_ref[:, 0:D]
    h = state_ref[:, D:2 * D]
    c = state_ref[:, 2 * D:3 * D]
    bh = jnp.concatenate([b, h], axis=1)                 # [TM, 2D]
    gates = jnp.dot(bh, wl_ref[...], preferred_element_type=f32) + bl_ref[...]
    i_g = jax.nn.sigmoid(gates[:, 0:D])
    f_g = jax.nn.sigmoid(gates[:, D:2 * D])
    g_g = jnp.tanh(gates[:, 2 * D:3 * D])
    o_g = jax.nn.sigmoid(gates[:, 3 * D:4 * D])
    c_new = f_g * c + i_g * g_g
    h_new = o_g * jnp.tanh(c_new)

    # ---- update set = neighbors of active sources  UNION  active sources --
    neib = jnp.sum(edge.astype(f32), axis=1, keepdims=True) > 0.0   # [TM,1]
    upd = jnp.logical_or(neib, act_ref[...] > 0.5)
    updb = jnp.broadcast_to(upd.astype(f32), (TM, D))

    # next_embd = conv_out + node_feat; x[updated nodes] = next_embd
    next_embd = h_new + nf_ref[...]
    x_new = updb * next_embd + (1.0 - updb) * x

    # lane-dense packed store: [x | h | c | upd] -> 4D = 128 lanes
    out_ref[...] = jnp.concatenate([x_new, h_new, c_new, updb], axis=1)


def pagnn_hop(adj_bf16, deg_pos, state, nf, prm, tm=128):
    """One broadcast hop.  state = packed [N, 4D] = [x | h | c | src_mask]."""
    Np = adj_bf16.shape[0]
    D = nf.shape[1]

    # small O(N*D) per-hop projections done in XLA; all O(N^2) work in Pallas
    smask = state[:, 3 * D]                              # current source mask [N]
    smask_row = smask[None, :]                           # [1, N]
    active_col = (smask * deg_pos)[:, None]              # active sources [N, 1]
    x = state[:, 0:D]
    xw = jnp.dot(x, prm["w"])                            # [N, D]
    alpha_src_row = jnp.dot(xw, prm["a_src"]).T          # [1, N]
    alpha_dst_col = jnp.dot(xw, prm["a_dst"])            # [N, 1]
    xw_bf16 = xw.astype(jnp.bfloat16)

    return pl.pallas_call(
        _pagnn_hop_kernel,
        grid=(Np // tm,),
        in_specs=[
            pl.BlockSpec((tm, Np), lambda i: (i, 0)),        # adjacency (streamed)
            pl.BlockSpec((1, Np), lambda i: (0, 0)),         # source mask row (resident)
            pl.BlockSpec((1, Np), lambda i: (0, 0)),         # alpha_src row (resident)
            pl.BlockSpec((tm, 1), lambda i: (i, 0)),         # alpha_dst column tile
            pl.BlockSpec((tm, 1), lambda i: (i, 0)),         # active-source column tile
            pl.BlockSpec((Np, D), lambda i: (0, 0)),         # xw bf16 (resident full)
            pl.BlockSpec((tm, 4 * D), lambda i: (i, 0)),     # packed state tile
            pl.BlockSpec((tm, D), lambda i: (i, 0)),         # node-feature tile
            pl.BlockSpec((1, D), lambda i: (0, 0)),          # GAT bias
            pl.BlockSpec((2 * D, 4 * D), lambda i: (0, 0)),  # fused LSTM weight
            pl.BlockSpec((1, 4 * D), lambda i: (0, 0)),      # fused LSTM bias
        ],
        out_specs=pl.BlockSpec((tm, 4 * D), lambda i: (i, 0)),
        out_shape=jax.ShapeDtypeStruct((Np, 4 * D), jnp.float32),
        compiler_params=pltpu.CompilerParams(
            dimension_semantics=("parallel",)),
    )(adj_bf16, smask_row, alpha_src_row, alpha_dst_col, active_col,
      xw_bf16, state, nf, prm["bias"], prm["w_lstm"], prm["b_lstm"])


def init_params(key, hidden, n_hops):
    D = hidden
    params = []
    for k in range(n_hops):
        keys = jax.random.split(jax.random.fold_in(key, k), 8)
        s = 0.2
        w_ih_t = s * jax.random.normal(keys[4], (D, 4 * D), jnp.float32)
        w_hh_t = s * jax.random.normal(keys[5], (D, 4 * D), jnp.float32)
        b_ih = s * jax.random.normal(keys[6], (1, 4 * D), jnp.float32)
        b_hh = s * jax.random.normal(keys[7], (1, 4 * D), jnp.float32)
        params.append(dict(
            w=s * jax.random.normal(keys[0], (D, D), jnp.float32),
            a_src=s * jax.random.normal(keys[1], (D, 1), jnp.float32),
            a_dst=s * jax.random.normal(keys[2], (D, 1), jnp.float32),
            bias=s * jax.random.normal(keys[3], (1, D), jnp.float32),
            # fused LSTM params: gates = [b, h] @ w_lstm + b_lstm
            w_lstm=jnp.concatenate([w_ih_t, w_hh_t], axis=0),    # [2D, 4D]
            b_lstm=b_ih + b_hh,                                  # [1, 4D]
        ))
    return params


def pagnn_broadcast_forward(node_feat, edge_index, root_index, num_nodes,
                            params, send_from_source=True, tm=128):
    """JAX glue reproducing PaGNNBroadcast.forward with dense masks."""
    D = node_feat.shape[1]
    N = num_nodes
    Np = ((N + tm - 1) // tm) * tm       # pad nodes to a multiple of the tile

    # bi_edges + unique -> symmetric 0/1 dense adjacency (bf16 in HBM)
    src, dst = edge_index[0], edge_index[1]
    adj = jnp.zeros((Np, Np), jnp.float32)
    adj = adj.at[src, dst].set(1.0)
    adj = adj.at[dst, src].set(1.0)
    deg_pos = (jnp.sum(adj, axis=1) > 0.0).astype(jnp.float32)   # [Np]
    adj_bf16 = adj.astype(jnp.bfloat16)

    roots = root_index.reshape(-1, 2)
    source_nodes = roots[:, 0] if send_from_source else roots[:, 1]
    smask0 = jnp.zeros((Np,), jnp.float32).at[source_nodes].set(1.0)

    nf = jnp.zeros((Np, D), jnp.float32).at[:N].set(node_feat)
    x0 = nf * smask0[:, None]                                    # keep_source_embd
    zeros = jnp.zeros((Np, D), jnp.float32)
    state = jnp.concatenate(
        [x0, zeros, zeros, jnp.broadcast_to(smask0[:, None], (Np, D))], axis=1)

    for prm in params:                    # n_hops is small and static
        state = pagnn_hop(adj_bf16, deg_pos, state, nf, prm, tm)
    return state[:N, :D]


if __name__ == "__main__":
    key = jax.random.PRNGKey(0)
    hidden = 32
    n_hops = 2
    group = 20                            # nodes per subgraph sample
    n_groups = 10
    num_nodes = group * n_groups          # 200 (padded to 256 inside wrapper)

    # chain edges inside each subgraph sample (forward symmetrizes them)
    base = jnp.arange(n_groups, dtype=jnp.int32) * group
    offs = jnp.arange(group - 1, dtype=jnp.int32)
    src = (base[:, None] + offs[None, :]).reshape(-1)
    dst = src + 1
    edge_index = jnp.stack([src, dst])                  # [2, E]
    # root_index reshaped to (-1, 2): (source, target) pair per sample
    root_index = jnp.stack([base, base + group // 2], axis=1).reshape(-1)

    node_feat = jax.random.normal(jax.random.fold_in(key, 100),
                                  (num_nodes, hidden), jnp.float32)
    params = init_params(key, hidden, n_hops)

    fwd = jax.jit(lambda nf: pagnn_broadcast_forward(
        nf, edge_index, root_index, num_nodes, params, send_from_source=True))
    out = fwd(node_feat)
    jax.block_until_ready(out)
    assert out.shape == (num_nodes, hidden)
    assert bool(jnp.all(jnp.isfinite(out)))
    print("KERNEL_OK")
</pallas_src>

<mosaic_0001>
module attributes {stable_mosaic.version = 11 : i64} {
  func.func @_pagnn_hop_kernel(%arg0: i32, %arg1: memref<128x256xbf16, #tpu.memory_space<vmem>>, %arg2: memref<1x256xf32, #tpu.memory_space<vmem>>, %arg3: memref<1x256xf32, #tpu.memory_space<vmem>>, %arg4: memref<128x1xf32, #tpu.memory_space<vmem>>, %arg5: memref<128x1xf32, #tpu.memory_space<vmem>>, %arg6: memref<256x32xbf16, #tpu.memory_space<vmem>>, %arg7: memref<128x128xf32, #tpu.memory_space<vmem>>, %arg8: memref<128x32xf32, #tpu.memory_space<vmem>>, %arg9: memref<1x32xf32, #tpu.memory_space<vmem>>, %arg10: memref<64x128xf32, #tpu.memory_space<vmem>>, %arg11: memref<1x128xf32, #tpu.memory_space<vmem>>, %arg12: memref<128x128xf32, #tpu.memory_space<vmem>>) attributes {dimension_semantics = [#tpu.dimension_semantics<parallel>], iteration_bounds = array<i64: 2>, scalar_prefetch = 0 : i64, scratch_operands = 0 : i64, tpu.core_type = #tpu.core_type<tc>, window_params = [{transform_indices = @transform_0, window_bounds = array<i64: 128, 256>}, {pipeline_mode = #tpu.pipeline_mode<synchronous>, transform_indices = @transform_1, window_bounds = array<i64: 1, 256>}, {pipeline_mode = #tpu.pipeline_mode<synchronous>, transform_indices = @transform_2, window_bounds = array<i64: 1, 256>}, {transform_indices = @transform_3, window_bounds = array<i64: 128, 1>}, {transform_indices = @transform_4, window_bounds = array<i64: 128, 1>}, {pipeline_mode = #tpu.pipeline_mode<synchronous>, transform_indices = @transform_5, window_bounds = array<i64: 256, 32>}, {transform_indices = @transform_6, window_bounds = array<i64: 128, 128>}, {transform_indices = @transform_7, window_bounds = array<i64: 128, 32>}, {pipeline_mode = #tpu.pipeline_mode<synchronous>, transform_indices = @transform_8, window_bounds = array<i64: 1, 32>}, {pipeline_mode = #tpu.pipeline_mode<synchronous>, transform_indices = @transform_9, window_bounds = array<i64: 64, 128>}, {pipeline_mode = #tpu.pipeline_mode<synchronous>, transform_indices = @transform_10, window_bounds = array<i64: 1, 128>}, {transform_indices = @transform_11, window_bounds = array<i64: 128, 128>}]} {
    %c128_i32 = arith.constant 128 : i32
    %0 = arith.muli %arg0, %c128_i32 : i32
    %c0 = arith.constant 0 : index
    %c0_0 = arith.constant 0 : index
    %1 = vector.load %arg1[%c0, %c0_0] : memref<128x256xbf16, #tpu.memory_space<vmem>>, vector<128x256xbf16>
    %cst = arith.constant 5.000000e-01 : bf16
    %2 = vector.broadcast %cst : bf16 to vector<128x256xbf16>
    %3 = arith.cmpf ogt, %1, %2 : vector<128x256xbf16>
    %c0_1 = arith.constant 0 : index
    %c0_2 = arith.constant 0 : index
    %4 = vector.load %arg2[%c0_1, %c0_2] : memref<1x256xf32, #tpu.memory_space<vmem>>, vector<1x256xf32>
    %cst_3 = arith.constant 5.000000e-01 : f32
    %5 = vector.broadcast %cst_3 : f32 to vector<1x256xf32>
    %6 = arith.cmpf ogt, %4, %5 : vector<1x256xf32>
    %7 = vector.broadcast %6 : vector<1x256xi1> to vector<128x256xi1>
    %8 = arith.andi %3, %7 : vector<128x256xi1>
    %9 = tpu.iota {dimensions = array<i32: 1>} : vector<128x256xi32>
    %10 = tpu.iota {dimensions = array<i32: 0>} : vector<128x256xi32>
    %11 = arith.subi %9, %10 : vector<128x256xi32>
    %12 = vector.broadcast %0 : i32 to vector<128x256xi32>
    %13 = arith.cmpi eq, %11, %12 : vector<128x256xi32>
    %14 = arith.ori %8, %13 : vector<128x256xi1>
    %c0_4 = arith.constant 0 : index
    %c0_5 = arith.constant 0 : index
    %15 = vector.load %arg4[%c0_4, %c0_5] : memref<128x1xf32, #tpu.memory_space<vmem>>, vector<128x1xf32>
    %c0_6 = arith.constant 0 : index
    %c0_7 = arith.constant 0 : index
    %16 = vector.load %arg3[%c0_6, %c0_7] : memref<1x256xf32, #tpu.memory_space<vmem>>, vector<1x256xf32>
    %17 = vector.broadcast %15 : vector<128x1xf32> to vector<128x256xf32>
    %18 = vector.broadcast %16 : vector<1x256xf32> to vector<128x256xf32>
    %19 = arith.addf %17, %18 : vector<128x256xf32>
    %cst_8 = arith.constant 0.000000e+00 : f32
    %20 = vector.broadcast %cst_8 : f32 to vector<128x256xf32>
    %21 = arith.cmpf ogt, %19, %20 : vector<128x256xf32>
    %cst_9 = arith.constant 2.000000e-01 : f32
    %22 = vector.broadcast %cst_9 : f32 to vector<128x256xf32>
    %23 = arith.mulf %22, %19 : vector<128x256xf32>
    %24 = arith.select %21, %19, %23 : vector<128x256xi1>, vector<128x256xf32>
    %cst_10 = arith.constant -1.000000e+30 : f32
    %25 = vector.broadcast %cst_10 : f32 to vector<128x256xf32>
    %26 = arith.select %14, %24, %25 : vector<128x256xi1>, vector<128x256xf32>
    %cst_11 = arith.constant dense<0xFF800000> : vector<128xf32>
    %27 = vector.multi_reduction <maximumf>, %26, %cst_11 [1] : vector<128x256xf32> to vector<128xf32>
    %28 = vector.shape_cast %27 : vector<128xf32> to vector<128x1xf32>
    %29 = vector.broadcast %28 : vector<128x1xf32> to vector<128x256xf32>
    %30 = arith.subf %26, %29 : vector<128x256xf32>
    %31 = math.exp %30 : vector<128x256xf32>
    %cst_12 = arith.constant dense<0.000000e+00> : vector<128xf32>
    %32 = vector.multi_reduction <add>, %31, %cst_12 [1] : vector<128x256xf32> to vector<128xf32>
    %33 = vector.shape_cast %32 : vector<128xf32> to vector<128x1xf32>
    %34 = arith.truncf %31 : vector<128x256xf32> to vector<128x256xbf16>
    %c0_13 = arith.constant 0 : index
    %c0_14 = arith.constant 0 : index
    %35 = vector.load %arg6[%c0_13, %c0_14] : memref<256x32xbf16, #tpu.memory_space<vmem>>, vector<256x32xbf16>
    %cst_15 = arith.constant dense<0.000000e+00> : vector<128x32xf32>
    %36 = tpu.matmul %34, %35, %cst_15 {dimension_numbers = #tpu.dot_dimension_numbers<[1], [0], [0], [1], [0, 0, 1, 1], [], []>} : vector<128x256xbf16>, vector<256x32xbf16>, vector<128x32xf32> -> vector<128x32xf32>
    %37 = tpu.reciprocal %33 {approx = true} : vector<128x1xf32> -> vector<128x1xf32>
    %38 = vector.broadcast %37 : vector<128x1xf32> to vector<128x32xf32>
    %39 = arith.mulf %36, %38 : vector<128x32xf32>
    %c0_16 = arith.constant 0 : index
    %c0_17 = arith.constant 0 : index
    %40 = vector.load %arg9[%c0_16, %c0_17] : memref<1x32xf32, #tpu.memory_space<vmem>>, vector<1x32xf32>
    %41 = vector.broadcast %40 : vector<1x32xf32> to vector<128x32xf32>
    %42 = arith.addf %39, %41 : vector<128x32xf32>
    %43 = math.tanh %42 : vector<128x32xf32>
    %c0_18 = arith.constant 0 : index
    %c0_19 = arith.constant 0 : index
    %44 = vector.load %arg7[%c0_18, %c0_19] : memref<128x128xf32, #tpu.memory_space<vmem>>, vector<128x32xf32>
    %c0_20 = arith.constant 0 : index
    %c32 = arith.constant 32 : index
    %45 = vector.load %arg7[%c0_20, %c32] : memref<128x128xf32, #tpu.memory_space<vmem>>, vector<128x32xf32>
    %c0_21 = arith.constant 0 : index
    %c64 = arith.constant 64 : index
    %46 = vector.load %arg7[%c0_21, %c64] : memref<128x128xf32, #tpu.memory_space<vmem>>, vector<128x32xf32>
    %47 = tpu.concatenate %43, %45 in 1 : vector<128x32xf32>, vector<128x32xf32> -> vector<128x64xf32>
    %c0_22 = arith.constant 0 : index
    %c0_23 = arith.constant 0 : index
    %48 = vector.load %arg10[%c0_22, %c0_23] : memref<64x128xf32, #tpu.memory_space<vmem>>, vector<64x128xf32>
    %cst_24 = arith.constant dense<0.000000e+00> : vector<128x128xf32>
    %49 = tpu.matmul %47, %48, %cst_24 {dimension_numbers = #tpu.dot_dimension_numbers<[1], [0], [0], [1], [0, 0, 1, 1], [], []>} : vector<128x64xf32>, vector<64x128xf32>, vector<128x128xf32> -> vector<128x128xf32>
    %c0_25 = arith.constant 0 : index
    %c0_26 = arith.constant 0 : index
    %50 = vector.load %arg11[%c0_25, %c0_26] : memref<1x128xf32, #tpu.memory_space<vmem>>, vector<1x128xf32>
    %51 = vector.broadcast %50 : vector<1x128xf32> to vector<128x128xf32>
    %52 = arith.addf %49, %51 : vector<128x128xf32>
    %53 = vector.extract_strided_slice %52 {offsets = [0, 0], sizes = [128, 32], strides = [1, 1]} : vector<128x128xf32> to vector<128x32xf32>
    %54 = arith.negf %53 : vector<128x32xf32>
    %55 = math.exp %54 : vector<128x32xf32>
    %cst_27 = arith.constant 1.000000e+00 : f32
    %56 = vector.broadcast %cst_27 : f32 to vector<128x32xf32>
    %57 = arith.addf %56, %55 : vector<128x32xf32>
    %58 = arith.divf %56, %57 : vector<128x32xf32>
    %59 = vector.extract_strided_slice %52 {offsets = [0, 32], sizes = [128, 32], strides = [1, 1]} : vector<128x128xf32> to vector<128x32xf32>
    %60 = arith.negf %59 : vector<128x32xf32>
    %61 = math.exp %60 : vector<128x32xf32>
    %cst_28 = arith.constant 1.000000e+00 : f32
    %62 = vector.broadcast %cst_28 : f32 to vector<128x32xf32>
    %63 = arith.addf %62, %61 : vector<128x32xf32>
    %64 = arith.divf %62, %63 : vector<128x32xf32>
    %65 = vector.extract_strided_slice %52 {offsets = [0, 64], sizes = [128, 32], strides = [1, 1]} : vector<128x128xf32> to vector<128x32xf32>
    %66 = math.tanh %65 : vector<128x32xf32>
    %67 = vector.extract_strided_slice %52 {offsets = [0, 96], sizes = [128, 32], strides = [1, 1]} : vector<128x128xf32> to vector<128x32xf32>
    %68 = arith.negf %67 : vector<128x32xf32>
    %69 = math.exp %68 : vector<128x32xf32>
    %cst_29 = arith.constant 1.000000e+00 : f32
    %70 = vector.broadcast %cst_29 : f32 to vector<128x32xf32>
    %71 = arith.addf %70, %69 : vector<128x32xf32>
    %72 = arith.divf %70, %71 : vector<128x32xf32>
    %73 = arith.mulf %64, %46 : vector<128x32xf32>
    %74 = arith.mulf %58, %66 : vector<128x32xf32>
    %75 = arith.addf %73, %74 : vector<128x32xf32>
    %76 = math.tanh %75 : vector<128x32xf32>
    %77 = arith.mulf %72, %76 : vector<128x32xf32>
    %78 = arith.extui %8 : vector<128x256xi1> to vector<128x256xi32>
    %79 = arith.sitofp %78 : vector<128x256xi32> to vector<128x256xf32>
    %cst_30 = arith.constant dense<0.000000e+00> : vector<128xf32>
    %80 = vector.multi_reduction <add>, %79, %cst_30 [1] : vector<128x256xf32> to vector<128xf32>
    %81 = vector.shape_cast %80 : vector<128xf32> to vector<128x1xf32>
    %cst_31 = arith.constant 0.000000e+00 : f32
    %82 = vector.broadcast %cst_31 : f32 to vector<128x1xf32>
    %83 = arith.cmpf ogt, %81, %82 : vector<128x1xf32>
    %c0_32 = arith.constant 0 : index
    %c0_33 = arith.constant 0 : index
    %84 = vector.load %arg5[%c0_32, %c0_33] : memref<128x1xf32, #tpu.memory_space<vmem>>, vector<128x1xf32>
    %cst_34 = arith.constant 5.000000e-01 : f32
    %85 = vector.broadcast %cst_34 : f32 to vector<128x1xf32>
    %86 = arith.cmpf ogt, %84, %85 : vector<128x1xf32>
    %87 = arith.ori %83, %86 : vector<128x1xi1>
    %88 = arith.extui %87 : vector<128x1xi1> to vector<128x1xi32>
    %89 = arith.sitofp %88 : vector<128x1xi32> to vector<128x1xf32>
    %90 = vector.shape_cast %89 : vector<128x1xf32> to vector<128x1xf32>
    %91 = vector.broadcast %90 : vector<128x1xf32> to vector<128x32xf32>
    %c0_35 = arith.constant 0 : index
    %c0_36 = arith.constant 0 : index
    %92 = vector.load %arg8[%c0_35, %c0_36] : memref<128x32xf32, #tpu.memory_space<vmem>>, vector<128x32xf32>
    %93 = arith.addf %77, %92 : vector<128x32xf32>
    %94 = arith.mulf %91, %93 : vector<128x32xf32>
    %cst_37 = arith.constant 1.000000e+00 : f32
    %95 = vector.broadcast %cst_37 : f32 to vector<128x32xf32>
    %96 = arith.subf %95, %91 : vector<128x32xf32>
    %97 = arith.mulf %96, %44 : vector<128x32xf32>
    %98 = arith.addf %94, %97 : vector<128x32xf32>
    %99 = tpu.concatenate %98, %77, %75, %91 in 1 : vector<128x32xf32>, vector<128x32xf32>, vector<128x32xf32>, vector<128x32xf32> -> vector<128x128xf32>
    %c0_38 = arith.constant 0 : index
    %c0_39 = arith.constant 0 : index
    %100 = vector.load %arg12[%c0_38, %c0_39] : memref<128x128xf32, #tpu.memory_space<vmem>>, vector<128x128xf32>
    tpu.vector_store %arg12[%c0_38, %c0_39], %99 {strides = array<i32>} : memref<128x128xf32, #tpu.memory_space<vmem>>, vector<128x128xf32>,
    return
  }
  func.func @transform_0(%arg0: i32) -> (i32, i32) {
    %c0_i32 = arith.constant 0 : i32
    %c0_i32_0 = arith.constant 0 : i32
    return %arg0, %c0_i32 : i32, i32
  }
  func.func @transform_1(%arg0: i32) -> (i32, i32) {
    %c0_i32 = arith.constant 0 : i32
    %c0_i32_0 = arith.constant 0 : i32
    %c0_i32_1 = arith.constant 0 : i32
    return %c0_i32, %c0_i32_0 : i32, i32
  }
  func.func @transform_2(%arg0: i32) -> (i32, i32) {
    %c0_i32 = arith.constant 0 : i32
    %c0_i32_0 = arith.constant 0 : i32
    %c0_i32_1 = arith.constant 0 : i32
    return %c0_i32, %c0_i32_0 : i32, i32
  }
  func.func @transform_3(%arg0: i32) -> (i32, i32) {
    %c0_i32 = arith.constant 0 : i32
    %c0_i32_0 = arith.constant 0 : i32
    return %arg0, %c0_i32 : i32, i32
  }
  func.func @transform_4(%arg0: i32) -> (i32, i32) {
    %c0_i32 = arith.constant 0 : i32
    %c0_i32_0 = arith.constant 0 : i32
    return %arg0, %c0_i32 : i32, i32
  }
  func.func @transform_5(%arg0: i32) -> (i32, i32) {
    %c0_i32 = arith.constant 0 : i32
    %c0_i32_0 = arith.constant 0 : i32
    %c0_i32_1 = arith.constant 0 : i32
    return %c0_i32, %c0_i32_0 : i32, i32
  }
  func.func @transform_6(%arg0: i32) -> (i32, i32) {
    %c0_i32 = arith.constant 0 : i32
    %c0_i32_0 = arith.constant 0 : i32
    return %arg0, %c0_i32 : i32, i32
  }
  func.func @transform_7(%arg0: i32) -> (i32, i32) {
    %c0_i32 = arith.constant 0 : i32
    %c0_i32_0 = arith.constant 0 : i32
    return %arg0, %c0_i32 : i32, i32
  }
  func.func @transform_8(%arg0: i32) -> (i32, i32) {
    %c0_i32 = arith.constant 0 : i32
    %c0_i32_0 = arith.constant 0 : i32
    %c0_i32_1 = arith.constant 0 : i32
    return %c0_i32, %c0_i32_0 : i32, i32
  }
  func.func @transform_9(%arg0: i32) -> (i32, i32) {
    %c0_i32 = arith.constant 0 : i32
    %c0_i32_0 = arith.constant 0 : i32
    %c0_i32_1 = arith.constant 0 : i32
    return %c0_i32, %c0_i32_0 : i32, i32
  }
  func.func @transform_10(%arg0: i32) -> (i32, i32) {
    %c0_i32 = arith.constant 0 : i32
    %c0_i32_0 = arith.constant 0 : i32
    %c0_i32_1 = arith.constant 0 : i32
    return %c0_i32, %c0_i32_0 : i32, i32
  }
  func.func @transform_11(%arg0: i32) -> (i32, i32) {
    %c0_i32 = arith.constant 0 : i32
    %c0_i32_0 = arith.constant 0 : i32
    return %arg0, %c0_i32 : i32, i32
  }
}

</mosaic_0001>

<llo_original>
// kernel: _lambda_.2
$region0: #{_lambda_.2}
  #allocation0 [shape = 'u32[]', space=smem, size = 0x4, offset = 0x4, fixed_abs, tag = 'smem constant byte address 0x4 - core index']
  #allocation1 [shape = 'u32[72,128]{1,0:T(1,128)}', space=vmem, size = 0x9000, scoped, tag = 'internal scratch']
  %s0 = inlined_call_operand.vmem [shape: bf16[256,256], index: 0, kind: input, shape index: {}]
  %s1 = inlined_call_operand.vmem [shape: f32[1,256], index: 1, kind: input, shape index: {}]
  %s2 = inlined_call_operand.vmem [shape: f32[1,256], index: 2, kind: input, shape index: {}]
  %s3 = inlined_call_operand.vmem [shape: f32[256,1], index: 3, kind: input, shape index: {}]
  %s4 = inlined_call_operand.vmem [shape: f32[256,1], index: 4, kind: input, shape index: {}]
  %s5 = inlined_call_operand.vmem [shape: bf16[256,32], index: 5, kind: input, shape index: {}]
  %s6 = inlined_call_operand.vmem [shape: f32[256,128], index: 6, kind: input, shape index: {}]
  %s7 = inlined_call_operand.vmem [shape: f32[256,32], index: 7, kind: input, shape index: {}]
  %s8 = inlined_call_operand.vmem [shape: f32[1,32], index: 8, kind: input, shape index: {}]
  %s9 = inlined_call_operand.vmem [shape: f32[64,128], index: 9, kind: input, shape index: {}]
  %s10 = inlined_call_operand.vmem [shape: f32[1,128], index: 10, kind: input, shape index: {}]
  %s11 = inlined_call_operand.vmem [shape: f32[256,128], index: 11, kind: output, shape index: {}]
  %s12 = sld [smem:[#allocation0]]
  $region77: #{_lambda_.2} parent=0
    _
  %s14 = ssub.s32 1, %s12
  %s15 = scalar_select 0, %s14, %s12
  loop: start=0, step=1, limit=4
  $region2: #{_lambda_.2} parent=0 // loop_pre_header
    _
  $region3: #{_lambda_.2} parent=0 // loop_header
    %s17 = sphi 0, %s21
    %p18 = scmp.ge.s32.totalorder %s17, 4
    %s27 = sphi 0, %s29
    %s30 = sphi 0, %s27
    %s31 = sphi 0, %s30
    %s47 = sphi 0, %s31
    %s51 = sphi 0, %s51
    %s53 = sphi 0, %s51
    %s54 = sphi 0, %s53
    %s68 = sphi 0, %s54
    %s72 = sphi 0, %s72
    %s74 = sphi 0, %s72
    %s75 = sphi 0, %s74
    %s89 = sphi 0, %s75
    %s95 = sphi 0, %s97
    %s98 = sphi 0, %s95
    %s99 = sphi 0, %s98
    %s115 = sphi 0, %s99
    %s121 = sphi 0, %s123
    %s124 = sphi 0, %s121
    %s125 = sphi 0, %s124
    %s141 = sphi 0, %s125
    %s145 = sphi 0, %s145
    %s147 = sphi 0, %s145
    %s148 = sphi 0, %s147
    %s162 = sphi 0, %s148
    %s168 = sphi 0, %s170
    %s171 = sphi 0, %s168
    %s172 = sphi 0, %s171
    %s188 = sphi 0, %s172
    %s194 = sphi 0, %s196
    %s197 = sphi 0, %s194
    %s198 = sphi 0, %s197
    %s214 = sphi 0, %s198
    %s218 = sphi 0, %s218
    %s220 = sphi 0, %s218
    %s221 = sphi 0, %s220
    %s235 = sphi 0, %s221
    %s239 = sphi 0, %s239
    %s241 = sphi 0, %s239
    %s242 = sphi 0, %s241
    %s256 = sphi 0, %s242
    %s260 = sphi 0, %s260
    %s262 = sphi 0, %s260
    %s263 = sphi 0, %s262
    %s277 = sphi 0, %s263
    %s283 = sphi 0, %s285
    %s286 = sphi 0, %s283
    %s287 = sphi 0, %s286
    %s303 = sphi 0, %s287
  $region4: #{_lambda_.2} parent=0 // loop_header_branch
    %20 = sbr.rel (%p18) target = $region8
  $region5: #{_lambda_.2} parent=0 // loop_body
    %s22 = ssub.s32 %s17, 1
    %s23 = ssub.s32 %s17, 2
    %s24 = sadd.s32 %s17, 1
    %s25 = ssub.s32 %s17, %s24
    %p26 = scmp.eq.s32.totalorder %s25, 0
    %s28 = sadd.s32 %s27, 1
    %s29 = scalar_select %p26, %s27, %s28
    %p32 = pneg %p26
    %p33 = scmp.eq.s32.totalorder %s17, 1
    %p34 = por %p32, %p33
    %p35 = scmp.ne.s32.totalorder %s27, %s30
    %p36 = scmp.eq.s32.totalorder %s17, 0
    %p37 = por %p35, %p36
    %p38 = scmp.ne.s32.totalorder %s27, %s30
    %p39 = scmp.eq.s32.totalorder %s22, 1
    %p40 = por %p38, %p39
    %p41 = scmp.ne.s32.totalorder %s30, %s31
    %p42 = scmp.eq.s32.totalorder %s22, 0
    %p43 = por %p41, %p42
    %p44 = scmp.ne.s32.totalorder %s30, %s31
    %p45 = scmp.eq.s32.totalorder %s23, 1
    %p46 = por %p44, %p45
    %p48 = scmp.ne.s32.totalorder %s31, %s47
    %p49 = scmp.eq.s32.totalorder %s23, 0
    %p50 = por %p48, %p49
    %s52 = sadd.s32 %s51, 1
    %p55 = scmp.eq.s32.totalorder %s17, 1
    %p56 = scmp.ne.s32.totalorder %s51, %s53
    %p57 = scmp.eq.s32.totalorder %s17, 0
    %p58 = por %p56, %p57
    %p59 = scmp.ne.s32.totalorder %s51, %s53
    %p60 = scmp.eq.s32.totalorder %s22, 1
    %p61 = por %p59, %p60
    %p62 = scmp.ne.s32.totalorder %s53, %s54
    %p63 = scmp.eq.s32.totalorder %s22, 0
    %p64 = por %p62, %p63
    %p65 = scmp.ne.s32.totalorder %s53, %s54
    %p66 = scmp.eq.s32.totalorder %s23, 1
    %p67 = por %p65, %p66
    %p69 = scmp.ne.s32.totalorder %s54, %s68
    %p70 = scmp.eq.s32.totalorder %s23, 0
    %p71 = por %p69, %p70
    %s73 = sadd.s32 %s72, 1
    %p76 = scmp.eq.s32.totalorder %s17, 1
    %p77 = scmp.ne.s32.totalorder %s72, %s74
    %p78 = scmp.eq.s32.totalorder %s17, 0
    %p79 = por %p77, %p78
    %p80 = scmp.ne.s32.totalorder %s72, %s74
    %p81 = scmp.eq.s32.totalorder %s22, 1
    %p82 = por %p80, %p81
    %p83 = scmp.ne.s32.totalorder %s74, %s75
    %p84 = scmp.eq.s32.totalorder %s22, 0
    %p85 = por %p83, %p84
    %p86 = scmp.ne.s32.totalorder %s74, %s75
    %p87 = scmp.eq.s32.totalorder %s23, 1
    %p88 = por %p86, %p87
    %p90 = scmp.ne.s32.totalorder %s75, %s89
    %p91 = scmp.eq.s32.totalorder %s23, 0
    %p92 = por %p90, %p91
    %s93 = ssub.s32 %s17, %s24
    %p94 = scmp.eq.s32.totalorder %s93, 0
    %s96 = sadd.s32 %s95, 1
    %s97 = scalar_select %p94, %s95, %s96
    %p100 = pneg %p94
    %p101 = scmp.eq.s32.totalorder %s17, 1
    %p102 = por %p100, %p101
    %p103 = scmp.ne.s32.totalorder %s95, %s98
    %p104 = scmp.eq.s32.totalorder %s17, 0
    %p105 = por %p103, %p104
    %p106 = scmp.ne.s32.totalorder %s95, %s98
    %p107 = scmp.eq.s32.totalorder %s22, 1
    %p108 = por %p106, %p107
    %p109 = scmp.ne.s32.totalorder %s98, %s99
    %p110 = scmp.eq.s32.totalorder %s22, 0
    %p111 = por %p109, %p110
    %p112 = scmp.ne.s32.totalorder %s98, %s99
    %p113 = scmp.eq.s32.totalorder %s23, 1
    %p114 = por %p112, %p113
    %p116 = scmp.ne.s32.totalorder %s99, %s115
    %p117 = scmp.eq.s32.totalorder %s23, 0
    %p118 = por %p116, %p117
    %s119 = ssub.s32 %s17, %s24
    %p120 = scmp.eq.s32.totalorder %s119, 0
    %s122 = sadd.s32 %s121, 1
    %s123 = scalar_select %p120, %s121, %s122
    %p126 = pneg %p120
    %p127 = scmp.eq.s32.totalorder %s17, 1
    %p128 = por %p126, %p127
    %p129 = scmp.ne.s32.totalorder %s121, %s124
    %p130 = scmp.eq.s32.totalorder %s17, 0
    %p131 = por %p129, %p130
    %p132 = scmp.ne.s32.totalorder %s121, %s124
    %p133 = scmp.eq.s32.totalorder %s22, 1
    %p134 = por %p132, %p133
    %p135 = scmp.ne.s32.totalorder %s124, %s125
    %p136 = scmp.eq.s32.totalorder %s22, 0
    %p137 = por %p135, %p136
    %p138 = scmp.ne.s32.totalorder %s124, %s125
    %p139 = scmp.eq.s32.totalorder %s23, 1
    %p140 = por %p138, %p139
    %p142 = scmp.ne.s32.totalorder %s125, %s141
    %p143 = scmp.eq.s32.totalorder %s23, 0
    %p144 = por %p142, %p143
    %s146 = sadd.s32 %s145, 1
    %p149 = scmp.eq.s32.totalorder %s17, 1
    %p150 = scmp.ne.s32.totalorder %s145, %s147
    %p151 = scmp.eq.s32.totalorder %s17, 0
    %p152 = por %p150, %p151
    %p153 = scmp.ne.s32.totalorder %s145, %s147
    %p154 = scmp.eq.s32.totalorder %s22, 1
    %p155 = por %p153, %p154
    %p156 = scmp.ne.s32.totalorder %s147, %s148
    %p157 = scmp.eq.s32.totalorder %s22, 0
    %p158 = por %p156, %p157
    %p159 = scmp.ne.s32.totalorder %s147, %s148
    %p160 = scmp.eq.s32.totalorder %s23, 1
    %p161 = por %p159, %p160
    %p163 = scmp.ne.s32.totalorder %s148, %s162
    %p164 = scmp.eq.s32.totalorder %s23, 0
    %p165 = por %p163, %p164
    %s166 = ssub.s32 %s17, %s24
    %p167 = scmp.eq.s32.totalorder %s166, 0
    %s169 = sadd.s32 %s168, 1
    %s170 = scalar_select %p167, %s168, %s169
    %p173 = pneg %p167
    %p174 = scmp.eq.s32.totalorder %s17, 1
    %p175 = por %p173, %p174
    %p176 = scmp.ne.s32.totalorder %s168, %s171
    %p177 = scmp.eq.s32.totalorder %s17, 0
    %p178 = por %p176, %p177
    %p179 = scmp.ne.s32.totalorder %s168, %s171
    %p180 = scmp.eq.s32.totalorder %s22, 1
    %p181 = por %p179, %p180
    %p182 = scmp.ne.s32.totalorder %s171, %s172
    %p183 = scmp.eq.s32.totalorder %s22, 0
    %p184 = por %p182, %p183
    %p185 = scmp.ne.s32.totalorder %s171, %s172
    %p186 = scmp.eq.s32.totalorder %s23, 1
    %p187 = por %p185, %p186
    %p189 = scmp.ne.s32.totalorder %s172, %s188
    %p190 = scmp.eq.s32.totalorder %s23, 0
    %p191 = por %p189, %p190
    %s192 = ssub.s32 %s17, %s24
    %p193 = scmp.eq.s32.totalorder %s192, 0
    %s195 = sadd.s32 %s194, 1
    %s196 = scalar_select %p193, %s194, %s195
    %p199 = pneg %p193
    %p200 = scmp.eq.s32.totalorder %s17, 1
    %p201 = por %p199, %p200
    %p202 = scmp.ne.s32.totalorder %s194, %s197
    %p203 = scmp.eq.s32.totalorder %s17, 0
    %p204 = por %p202, %p203
    %p205 = scmp.ne.s32.totalorder %s194, %s197
    %p206 = scmp.eq.s32.totalorder %s22, 1
    %p207 = por %p205, %p206
    %p208 = scmp.ne.s32.totalorder %s197, %s198
    %p209 = scmp.eq.s32.totalorder %s22, 0
    %p210 = por %p208, %p209
    %p211 = scmp.ne.s32.totalorder %s197, %s198
    %p212 = scmp.eq.s32.totalorder %s23, 1
    %p213 = por %p211, %p212
    %p215 = scmp.ne.s32.totalorder %s198, %s214
    %p216 = scmp.eq.s32.totalorder %s23, 0
    %p217 = por %p215, %p216
    %s219 = sadd.s32 %s218, 1
    %p222 = scmp.eq.s32.totalorder %s17, 1
    %p223 = scmp.ne.s32.totalorder %s218, %s220
    %p224 = scmp.eq.s32.totalorder %s17, 0
    %p225 = por %p223, %p224
    %p226 = scmp.ne.s32.totalorder %s218, %s220
    %p227 = scmp.eq.s32.totalorder %s22, 1
    %p228 = por %p226, %p227
    %p229 = scmp.ne.s32.totalorder %s220, %s221
    %p230 = scmp.eq.s32.totalorder %s22, 0
    %p231 = por %p229, %p230
    %p232 = scmp.ne.s32.totalorder %s220, %s221
    %p233 = scmp.eq.s32.totalorder %s23, 1
    %p234 = por %p232, %p233
    %p236 = scmp.ne.s32.totalorder %s221, %s235
    %p237 = scmp.eq.s32.totalorder %s23, 0
    %p238 = por %p236, %p237
    %s240 = sadd.s32 %s239, 1
    %p243 = scmp.eq.s32.totalorder %s17, 1
    %p244 = scmp.ne.s32.totalorder %s239, %s241
    %p245 = scmp.eq.s32.totalorder %s17, 0
    %p246 = por %p244, %p245
    %p247 = scmp.ne.s32.totalorder %s239, %s241
    %p248 = scmp.eq.s32.totalorder %s22, 1
    %p249 = por %p247, %p248
    %p250 = scmp.ne.s32.totalorder %s241, %s242
    %p251 = scmp.eq.s32.totalorder %s22, 0
    %p252 = por %p250, %p251
    %p253 = scmp.ne.s32.totalorder %s241, %s242
    %p254 = scmp.eq.s32.totalorder %s23, 1
    %p255 = por %p253, %p254
    %p257 = scmp.ne.s32.totalorder %s242, %s256
    %p258 = scmp.eq.s32.totalorder %s23, 0
    %p259 = por %p257, %p258
    %s261 = sadd.s32 %s260, 1
    %p264 = scmp.eq.s32.totalorder %s17, 1
    %p265 = scmp.ne.s32.totalorder %s260, %s262
    %p266 = scmp.eq.s32.totalorder %s17, 0
    %p267 = por %p265, %p266
    %p268 = scmp.ne.s32.totalorder %s260, %s262
    %p269 = scmp.eq.s32.totalorder %s22, 1
    %p270 = por %p268, %p269
    %p271 = scmp.ne.s32.totalorder %s262, %s263
    %p272 = scmp.eq.s32.totalorder %s22, 0
    %p273 = por %p271, %p272
    %p274 = scmp.ne.s32.totalorder %s262, %s263
    %p275 = scmp.eq.s32.totalorder %s23, 1
    %p276 = por %p274, %p275
    %p278 = scmp.ne.s32.totalorder %s263, %s277
    %p279 = scmp.eq.s32.totalorder %s23, 0
    %p280 = por %p278, %p279
    %s281 = ssub.s32 %s17, %s24
    %p282 = scmp.eq.s32.totalorder %s281, 0
    %s284 = sadd.s32 %s283, 1
    %s285 = scalar_select %p282, %s283, %s284
    %p288 = pneg %p282
    %p289 = scmp.eq.s32.totalorder %s17, 1
    %p290 = por %p288, %p289
    %p291 = scmp.ne.s32.totalorder %s283, %s286
    %p292 = scmp.eq.s32.totalorder %s17, 0
    %p293 = por %p291, %p292
    %p294 = scmp.ne.s32.totalorder %s283, %s286
    %p295 = scmp.eq.s32.totalorder %s22, 1
    %p296 = por %p294, %p295
    %p297 = scmp.ne.s32.totalorder %s286, %s287
    %p298 = scmp.eq.s32.totalorder %s22, 0
    %p299 = por %p297, %p298
    %p300 = scmp.ne.s32.totalorder %s286, %s287
    %p301 = scmp.eq.s32.totalorder %s23, 1
    %p302 = por %p300, %p301
    %p304 = scmp.ne.s32.totalorder %s287, %s303
    %p305 = scmp.eq.s32.totalorder %s23, 0
    %p306 = por %p304, %p305
    %p307 = scmp.le.s32.totalorder 1, %s17
    %p308 = scmp.lt.s32.totalorder %s17, 3
    %p309 = pnand %p307, %p308
    %p310 = pneg %p309
    // Predicated region
    $region9: #{_lambda_.2} parent=5 // pred_check
      _
    $region10: #{_lambda_.2} parent=5 // pred_check_branch
      %312 = sbr.rel (%p309) target = $region12
    $region11: #{_lambda_.2} parent=5 // pred_region
      %s313 = ssub.s32 %s17, 1
      // Predicated region
      $region13: #{_lambda_.2} parent=11 // pred_check
        %p314 = pneg %p64
      $region14: #{_lambda_.2} parent=11 // pred_check_branch
        %316 = sbr.rel (%p314) target = $region16
      $region15: #{_lambda_.2} parent=11 // pred_region
        _
      $region16: #{_lambda_.2} parent=11 // pred_fallthru
        _
      // Predicated region
      $region17: #{_lambda_.2} parent=11 // pred_check
        %p317 = pneg %p85
      $region18: #{_lambda_.2} parent=11 // pred_check_branch
        %319 = sbr.rel (%p317) target = $region20
      $region19: #{_lambda_.2} parent=11 // pred_region
        _
      $region20: #{_lambda_.2} parent=11 // pred_fallthru
        _
      // Predicated region
      $region21: #{_lambda_.2} parent=11 // pred_check
        %p320 = pneg %p158
      $region22: #{_lambda_.2} parent=11 // pred_check_branch
        %322 = sbr.rel (%p320) target = $region24
      $region23: #{_lambda_.2} parent=11 // pred_region
        _
      $region24: #{_lambda_.2} parent=11 // pred_fallthru
        _
      // Predicated region
      $region25: #{_lambda_.2} parent=11 // pred_check
        %p323 = pneg %p231
      $region26: #{_lambda_.2} parent=11 // pred_check_branch
        %325 = sbr.rel (%p323) target = $region28
      $region27: #{_lambda_.2} parent=11 // pred_region
        _
      $region28: #{_lambda_.2} parent=11 // pred_fallthru
        _
      // Predicated region
      $region29: #{_lambda_.2} parent=11 // pred_check
        %p326 = pneg %p252
      $region30: #{_lambda_.2} parent=11 // pred_check_branch
        %328 = sbr.rel (%p326) target = $region32
      $region31: #{_lambda_.2} parent=11 // pred_region
        _
      $region32: #{_lambda_.2} parent=11 // pred_fallthru
        _
      // Predicated region
      $region33: #{_lambda_.2} parent=11 // pred_check
        %p329 = pneg %p273
      $region34: #{_lambda_.2} parent=11 // pred_check_branch
        %331 = sbr.rel (%p329) target = $region36
      $region35: #{_lambda_.2} parent=11 // pred_region
        _
      $region36: #{_lambda_.2} parent=11 // pred_fallthru
        _
    $region12: #{_lambda_.2} parent=5 // pred_fallthru
      _
    %p332 = scmp.lt.s32.totalorder %s17, 2
    // Predicated region
    $region37: #{_lambda_.2} parent=5 // pred_check
      %p333 = pneg %p332
    $region38: #{_lambda_.2} parent=5 // pred_check_branch
      %335 = sbr.rel (%p333) target = $region40
    $region39: #{_lambda_.2} parent=5 // pred_region
      // Predicated region
      $region41: #{_lambda_.2} parent=39 // pred_check
        %p336 = pneg %p37
      $region42: #{_lambda_.2} parent=39 // pred_check_branch
        %338 = sbr.rel (%p336) target = $region44
      $region43: #{_lambda_.2} parent=39 // pred_region
        %s339 = smul.u32 16, %s17
        %p340 = scmp.lt.s32.totalorder %s339, 31
        %s341 = scalar_select %p340, %s339, 31
        %s342 = smul.addr %s341, 2
        %s343 = smul.addr %s342, 4
        %s344 = scalar_lea.vmem %s0, %s343
        %s345 = smul.u32 16, %s17
      $region44: #{_lambda_.2} parent=39 // pred_fallthru
        _
      // Predicated region
      $region45: #{_lambda_.2} parent=39 // pred_check
        %p346 = pneg %p105
      $region46: #{_lambda_.2} parent=39 // pred_check_branch
        %348 = sbr.rel (%p346) target = $region48
      $region47: #{_lambda_.2} parent=39 // pred_region
        %s349 = smul.u32 16, %s17
        %p350 = scmp.lt.s32.totalorder %s349, 31
        %s351 = scalar_select %p350, %s349, 31
        %s352 = smul.addr %s351, 8
        %s353 = scalar_lea.vmem %s3, %s352
        %s354 = smul.u32 16, %s17
      $region48: #{_lambda_.2} parent=39 // pred_fallthru
        _
      // Predicated region
      $region49: #{_lambda_.2} parent=39 // pred_check
        %p355 = pneg %p131
      $region50: #{_lambda_.2} parent=39 // pred_check_branch
        %357 = sbr.rel (%p355) target = $region52
      $region51: #{_lambda_.2} parent=39 // pred_region
        %s358 = smul.u32 16, %s17
        %p359 = scmp.lt.s32.totalorder %s358, 31
        %s360 = scalar_select %p359, %s358, 31
        %s361 = smul.addr %s360, 8
        %s362 = scalar_lea.vmem %s4, %s361
        %s363 = smul.u32 16, %s17
      $region52: #{_lambda_.2} parent=39 // pred_fallthru
        _
      // Predicated region
      $region53: #{_lambda_.2} parent=39 // pred_check
        %p364 = pneg %p178
      $region54: #{_lambda_.2} parent=39 // pred_check_branch
        %366 = sbr.rel (%p364) target = $region56
      $region55: #{_lambda_.2} parent=39 // pred_region
        %s367 = smul.u32 16, %s17
        %p368 = scmp.lt.s32.totalorder %s367, 31
        %s369 = scalar_select %p368, %s367, 31
        %s370 = smul.addr %s369, 8
        %s371 = scalar_lea.vmem %s6, %s370
        %s372 = smul.u32 16, %s17
      $region56: #{_lambda_.2} parent=39 // pred_fallthru
        _
      // Predicated region
      $region57: #{_lambda_.2} parent=39 // pred_check
        %p373 = pneg %p204
      $region58: #{_lambda_.2} parent=39 // pred_check_branch
        %375 = sbr.rel (%p373) target = $region60
      $region59: #{_lambda_.2} parent=39 // pred_region
        %s376 = smul.u32 16, %s17
        %p377 = scmp.lt.s32.totalorder %s376, 31
        %s378 = scalar_select %p377, %s376, 31
        %s379 = smul.addr %s378, 8
        %s380 = scalar_lea.vmem %s7, %s379
        %s381 = smul.u32 16, %s17
      $region60: #{_lambda_.2} parent=39 // pred_fallthru
        _
    $region40: #{_lambda_.2} parent=5 // pred_fallthru
      _
    %p382 = scmp.le.s32.totalorder 1, %s17
    %p383 = scmp.lt.s32.totalorder %s17, 3
    %p384 = pnand %p382, %p383
    %p385 = pneg %p384
    // Predicated region
    $region61: #{_lambda_.2} parent=5 // pred_check
      _
    $region62: #{_lambda_.2} parent=5 // pred_check_branch
      %387 = sbr.rel (%p384) target = $region64
    $region63: #{_lambda_.2} parent=5 // pred_region
      %s388 = ssub.s32 %s17, 1
      %s389 = smul.u32 16, %s22
      %p390 = scmp.lt.s32.totalorder %s389, 31
      %s391 = scalar_select %p390, %s389, 31
      %s392 = smul.addr %s391, 2
      %s393 = smul.addr %s392, 4
      %s394 = scalar_lea.vmem %s0, %s393
      %p395 = pneg %p43
      %p396 = pneg %p40
      %p397 = pneg %p64
      %p398 = pneg %p61
      %p399 = pneg %p85
      %p400 = pneg %p82
      %s401 = smul.u32 16, %s22
      %p402 = scmp.lt.s32.totalorder %s401, 31
      %s403 = scalar_select %p402, %s401, 31
      %s404 = smul.addr %s403, 8
      %s405 = scalar_lea.vmem %s3, %s404
      %p406 = pneg %p111
      %p407 = pneg %p108
      %s408 = smul.u32 16, %s22
      %p409 = scmp.lt.s32.totalorder %s408, 31
      %s410 = scalar_select %p409, %s408, 31
      %s411 = smul.addr %s410, 8
      %s412 = scalar_lea.vmem %s4, %s411
      %p413 = pneg %p137
      %p414 = pneg %p134
      %p415 = pneg %p158
      %p416 = pneg %p155
      %s417 = smul.u32 16, %s22
      %p418 = scmp.lt.s32.totalorder %s417, 31
      %s419 = scalar_select %p418, %s417, 31
      %s420 = smul.addr %s419, 8
      %s421 = scalar_lea.vmem %s6, %s420
      %p422 = pneg %p184
      %p423 = pneg %p181
      %s424 = smul.u32 16, %s22
      %p425 = scmp.lt.s32.totalorder %s424, 31
      %s426 = scalar_select %p425, %s424, 31
      %s427 = smul.addr %s426, 8
      %s428 = scalar_lea.vmem %s7, %s427
      %p429 = pneg %p210
      %p430 = pneg %p207
      %p431 = pneg %p231
      %p432 = pneg %p228
      %p433 = pneg %p252
      %p434 = pneg %p249
      %p435 = pneg %p273
      %p436 = pneg %p270
      %p437 = pneg %p299
      %p438 = pneg %p296
      %s439 = smul.u32 16, %s22
      %p440 = scmp.lt.s32.totalorder %s439, 31
      %s441 = scalar_select %p440, %s439, 31
      %s442 = smul.addr %s441, 8
      %s443 = scalar_lea.vmem %s11, %s442
      %s444 = smul.u32 16, %s22
      %p445 = scmp.lt.s32.totalorder %s444, 31
      %s446 = scalar_select %p445, %s444, 31
      %s447 = smul.addr %s446, 2
      %s448 = smul.addr %s447, 4
      %s449 = scalar_lea.vmem %s0, %s448
      %s450 = smul.u32 16, %s22
      %s451 = smul.u32 16, %s22
      %p452 = scmp.lt.s32.totalorder %s451, 31
      %s453 = scalar_select %p452, %s451, 31
      %s454 = smul.addr %s453, 8
      %s455 = scalar_lea.vmem %s3, %s454
      %s456 = smul.u32 16, %s22
      %s457 = smul.u32 16, %s22
      %p458 = scmp.lt.s32.totalorder %s457, 31
      %s459 = scalar_select %p458, %s457, 31
      %s460 = smul.addr %s459, 8
      %s461 = scalar_lea.vmem %s4, %s460
      %s462 = smul.u32 16, %s22
      %s463 = smul.u32 16, %s22
      %p464 = scmp.lt.s32.totalorder %s463, 31
      %s465 = scalar_select %p464, %s463, 31
      %s466 = smul.addr %s465, 8
      %s467 = scalar_lea.vmem %s6, %s466
      %s468 = smul.u32 16, %s22
      %s469 = smul.u32 16, %s22
      %p470 = scmp.lt.s32.totalorder %s469, 31
      %s471 = scalar_select %p470, %s469, 31
      %s472 = smul.addr %s471, 8
      %s473 = scalar_lea.vmem %s7, %s472
      %s474 = smul.u32 16, %s22
      %s475 = smul.u32 16, %s22
      %p476 = scmp.lt.s32.totalorder %s475, 31
      %s477 = scalar_select %p476, %s475, 31
      %s478 = smul.addr %s477, 8
      %s479 = scalar_lea.vmem %s11, %s478
      %s480 = smul.u32 16, %s22
      %s481 = smul.u32 %s22, 128
      %v482 = vld [vmem:[%s449] sm:$0xff]
      %v483 = vld [vmem:[%s449 + $0x8] sm:$0xff]
      %v484 = vld [vmem:[%s449 + $0x10] sm:$0xff]
      %v485 = vld [vmem:[%s449 + $0x18] sm:$0xff]
      %v486 = vld [vmem:[%s449 + $0x20] sm:$0xff]
      %v487 = vld [vmem:[%s449 + $0x28] sm:$0xff]
      %v488 = vld [vmem:[%s449 + $0x30] sm:$0xff]
      %v489 = vld [vmem:[%s449 + $0x38] sm:$0xff]
      %v490 = vld [vmem:[%s449 + $0x40] sm:$0xff]
      %v491 = vld [vmem:[%s449 + $0x48] sm:$0xff]
      %v492 = vld [vmem:[%s449 + $0x50] sm:$0xff]
      %v493 = vld [vmem:[%s449 + $0x58] sm:$0xff]
      %v494 = vld [vmem:[%s449 + $0x60] sm:$0xff]
      %v495 = vld [vmem:[%s449 + $0x68] sm:$0xff]
      %v496 = vld [vmem:[%s449 + $0x70] sm:$0xff]
      %v497 = vld [vmem:[%s449 + $0x78] sm:$0xff]
      %v498 = vunpack.c.l.bf16 %v482
      %v499 = vunpack.c.h.bf16 %v482
      %v500 = vunpack.c.l.bf16 %v483
      %v501 = vunpack.c.h.bf16 %v483
      %v502 = vunpack.c.l.bf16 %v484
      %v503 = vunpack.c.h.bf16 %v484
      %v504 = vunpack.c.l.bf16 %v485
      %v505 = vunpack.c.h.bf16 %v485
      %v506 = vunpack.c.l.bf16 %v486
      %v507 = vunpack.c.h.bf16 %v486
      %v508 = vunpack.c.l.bf16 %v487
      %v509 = vunpack.c.h.bf16 %v487
      %v510 = vunpack.c.l.bf16 %v488
      %v511 = vunpack.c.h.bf16 %v488
      %v512 = vunpack.c.l.bf16 %v489
      %v513 = vunpack.c.h.bf16 %v489
      %v514 = vunpack.c.l.bf16 %v490
      %v515 = vunpack.c.h.bf16 %v490
      %v516 = vunpack.c.l.bf16 %v491
      %v517 = vunpack.c.h.bf16 %v491
      %v518 = vunpack.c.l.bf16 %v492
      %v519 = vunpack.c.h.bf16 %v492
      %v520 = vunpack.c.l.bf16 %v493
      %v521 = vunpack.c.h.bf16 %v493
      %v522 = vunpack.c.l.bf16 %v494
      %v523 = vunpack.c.h.bf16 %v494
      %v524 = vunpack.c.l.bf16 %v495
      %v525 = vunpack.c.h.bf16 %v495
      %v526 = vunpack.c.l.bf16 %v496
      %v527 = vunpack.c.h.bf16 %v496
      %v528 = vunpack.c.l.bf16 %v497
      %v529 = vunpack.c.h.bf16 %v497
      %vm530 = vcmp.gt.f32.partialorder %v498, 0.5
      %vm531 = vcmp.gt.f32.partialorder %v499, 0.5
      %vm532 = vcmp.gt.f32.partialorder %v500, 0.5
      %vm533 = vcmp.gt.f32.partialorder %v501, 0.5
      %vm534 = vcmp.gt.f32.partialorder %v502, 0.5
      %vm535 = vcmp.gt.f32.partialorder %v503, 0.5
      %vm536 = vcmp.gt.f32.partialorder %v504, 0.5
      %vm537 = vcmp.gt.f32.partialorder %v505, 0.5
      %vm538 = vcmp.gt.f32.partialorder %v506, 0.5
      %vm539 = vcmp.gt.f32.partialorder %v507, 0.5
      %vm540 = vcmp.gt.f32.partialorder %v508, 0.5
      %vm541 = vcmp.gt.f32.partialorder %v509, 0.5
      %vm542 = vcmp.gt.f32.partialorder %v510, 0.5
      %vm543 = vcmp.gt.f32.partialorder %v511, 0.5
      %vm544 = vcmp.gt.f32.partialorder %v512, 0.5
      %vm545 = vcmp.gt.f32.partialorder %v513, 0.5
      %vm546 = vcmp.gt.f32.partialorder %v514, 0.5
      %vm547 = vcmp.gt.f32.partialorder %v515, 0.5
      %vm548 = vcmp.gt.f32.partialorder %v516, 0.5
      %vm549 = vcmp.gt.f32.partialorder %v517, 0.5
      %vm550 = vcmp.gt.f32.partialorder %v518, 0.5
      %vm551 = vcmp.gt.f32.partialorder %v519, 0.5
      %vm552 = vcmp.gt.f32.partialorder %v520, 0.5
      %vm553 = vcmp.gt.f32.partialorder %v521, 0.5
      %vm554 = vcmp.gt.f32.partialorder %v522, 0.5
      %vm555 = vcmp.gt.f32.partialorder %v523, 0.5
      %vm556 = vcmp.gt.f32.partialorder %v524, 0.5
      %vm557 = vcmp.gt.f32.partialorder %v525, 0.5
      %vm558 = vcmp.gt.f32.partialorder %v526, 0.5
      %vm559 = vcmp.gt.f32.partialorder %v527, 0.5
      %vm560 = vcmp.gt.f32.partialorder %v528, 0.5
      %vm561 = vcmp.gt.f32.partialorder %v529, 0.5
      %v562 = vld [vmem:[%s1] sm:$0x3]
      %vm563 = vcmp.gt.f32.partialorder %v562, 0.5
      %v564 = vsel %vm563, 1, 0
      %v565 = vperm.slane %v564, 0
      %v566 = vperm.slane %v564, 1
      %vm567 = vcmp.eq.s32.totalorder %v565, 1
      %vm568 = vcmp.eq.s32.totalorder %v566, 1
      %vm569 = vmand %vm530, %vm567
      %vm570 = vmand %vm531, %vm568
      %vm571 = vmand %vm532, %vm567
      %vm572 = vmand %vm533, %vm568
      %vm573 = vmand %vm534, %vm567
      %vm574 = vmand %vm535, %vm568
      %vm575 = vmand %vm536, %vm567
      %vm576 = vmand %vm537, %vm568
      %vm577 = vmand %vm538, %vm567
      %vm578 = vmand %vm539, %vm568
      %vm579 = vmand %vm540, %vm567
      %vm580 = vmand %vm541, %vm568
      %vm581 = vmand %vm542, %vm567
      %vm582 = vmand %vm543, %vm568
      %vm583 = vmand %vm544, %vm567
      %vm584 = vmand %vm545, %vm568
      %vm585 = vmand %vm546, %vm567
      %vm586 = vmand %vm547, %vm568
      %vm587 = vmand %vm548, %vm567
      %vm588 = vmand %vm549, %vm568
      %vm589 = vmand %vm550, %vm567
      %vm590 = vmand %vm551, %vm568
      %vm591 = vmand %vm552, %vm567
      %vm592 = vmand %vm553, %vm568
      %vm593 = vmand %vm554, %vm567
      %vm594 = vmand %vm555, %vm568
      %vm595 = vmand %vm556, %vm567
      %vm596 = vmand %vm557, %vm568
      %vm597 = vmand %vm558, %vm567
      %vm598 = vmand %vm559, %vm568
      %vm599 = vmand %vm560, %vm567
      %vm600 = vmand %vm561, %vm568
      %v601 = vlaneseq
      %v602 = vand.u32 %v601, 127
      %v603 = vadd.s32 %v602, 128
      %v604 = vlaneseq
      %v605 = vshrl.u32 %v604, 7
      %v606 = vadd.s32 %v605, 8
      %v607 = vadd.s32 %v605, 16
      %v608 = vadd.s32 %v605, 24
      %v609 = vadd.s32 %v605, 32
      %v610 = vadd.s32 %v605, 40
      %v611 = vadd.s32 %v605, 48
      %v612 = vadd.s32 %v605, 56
      %v613 = vadd.s32 %v605, 64
      %v614 = vadd.s32 %v605, 72
      %v615 = vadd.s32 %v605, 80
      %v616 = vadd.s32 %v605, 88
      %v617 = vadd.s32 %v605, 96
      %v618 = vadd.s32 %v605, 104
      %v619 = vadd.s32 %v605, 112
      %v620 = vadd.s32 %v605, 120
      %v621 = vsub.s32 %v602, %v605
      %v622 = vsub.s32 %v603, %v605
      %v623 = vsub.s32 %v602, %v606
      %v624 = vsub.s32 %v603, %v606
      %v625 = vsub.s32 %v602, %v607
      %v626 = vsub.s32 %v603, %v607
      %v627 = vsub.s32 %v602, %v608
      %v628 = vsub.s32 %v603, %v608
      %v629 = vsub.s32 %v602, %v609
      %v630 = vsub.s32 %v603, %v609
      %v631 = vsub.s32 %v602, %v610
      %v632 = vsub.s32 %v603, %v610
      %v633 = vsub.s32 %v602, %v611
      %v634 = vsub.s32 %v603, %v611
      %v635 = vsub.s32 %v602, %v612
      %v636 = vsub.s32 %v603, %v612
      %v637 = vsub.s32 %v602, %v613
      %v638 = vsub.s32 %v603, %v613
      %v639 = vsub.s32 %v602, %v614
      %v640 = vsub.s32 %v603, %v614
      %v641 = vsub.s32 %v602, %v615
      %v642 = vsub.s32 %v603, %v615
      %v643 = vsub.s32 %v602, %v616
      %v644 = vsub.s32 %v603, %v616
      %v645 = vsub.s32 %v602, %v617
      %v646 = vsub.s32 %v603, %v617
      %v647 = vsub.s32 %v602, %v618
      %v648 = vsub.s32 %v603, %v618
      %v649 = vsub.s32 %v602, %v619
      %v650 = vsub.s32 %v603, %v619
      %v651 = vsub.s32 %v602, %v620
      %v652 = vsub.s32 %v603, %v620
      %v653 = vstv %s481
      %vm654 = vcmp.eq.s32.totalorder %v621, %v653
      %vm655 = vcmp.eq.s32.totalorder %v622, %v653
      %vm656 = vcmp.eq.s32.totalorder %v623, %v653
      %vm657 = vcmp.eq.s32.totalorder %v624, %v653
      %vm658 = vcmp.eq.s32.totalorder %v625, %v653
      %vm659 = vcmp.eq.s32.totalorder %v626, %v653
      %vm660 = vcmp.eq.s32.totalorder %v627, %v653
      %vm661 = vcmp.eq.s32.totalorder %v628, %v653
      %vm662 = vcmp.eq.s32.totalorder %v629, %v653
      %vm663 = vcmp.eq.s32.totalorder %v630, %v653
      %vm664 = vcmp.eq.s32.totalorder %v631, %v653
      %vm665 = vcmp.eq.s32.totalorder %v632, %v653
      %vm666 = vcmp.eq.s32.totalorder %v633, %v653
      %vm667 = vcmp.eq.s32.totalorder %v634, %v653
      %vm668 = vcmp.eq.s32.totalorder %v635, %v653
      %vm669 = vcmp.eq.s32.totalorder %v636, %v653
      %vm670 = vcmp.eq.s32.totalorder %v637, %v653
      %vm671 = vcmp.eq.s32.totalorder %v638, %v653
      %vm672 = vcmp.eq.s32.totalorder %v639, %v653
      %vm673 = vcmp.eq.s32.totalorder %v640, %v653
      %vm674 = vcmp.eq.s32.totalorder %v641, %v653
      %vm675 = vcmp.eq.s32.totalorder %v642, %v653
      %vm676 = vcmp.eq.s32.totalorder %v643, %v653
      %vm677 = vcmp.eq.s32.totalorder %v644, %v653
      %vm678 = vcmp.eq.s32.totalorder %v645, %v653
      %vm679 = vcmp.eq.s32.totalorder %v646, %v653
      %vm680 = vcmp.eq.s32.totalorder %v647, %v653
      %vm681 = vcmp.eq.s32.totalorder %v648, %v653
      %vm682 = vcmp.eq.s32.totalorder %v649, %v653
      %vm683 = vcmp.eq.s32.totalorder %v650, %v653
      %vm684 = vcmp.eq.s32.totalorder %v651, %v653
      %vm685 = vcmp.eq.s32.totalorder %v652, %v653
      %vm686 = vmor %vm569, %vm654
      %vm687 = vmor %vm570, %vm655
      %vm688 = vmor %vm571, %vm656
      %vm689 = vmor %vm572, %vm657
      %vm690 = vmor %vm573, %vm658
      %vm691 = vmor %vm574, %vm659
      %vm692 = vmor %vm575, %vm660
      %vm693 = vmor %vm576, %vm661
      %vm694 = vmor %vm577, %vm662
      %vm695 = vmor %vm578, %vm663
      %vm696 = vmor %vm579, %vm664
      %vm697 = vmor %vm580, %vm665
      %vm698 = vmor %vm581, %vm666
      %vm699 = vmor %vm582, %vm667
      %vm700 = vmor %vm583, %vm668
      %vm701 = vmor %vm584, %vm669
      %vm702 = vmor %vm585, %vm670
      %vm703 = vmor %vm586, %vm671
      %vm704 = vmor %vm587, %vm672
      %vm705 = vmor %vm588, %vm673
      %vm706 = vmor %vm589, %vm674
      %vm707 = vmor %vm590, %vm675
      %vm708 = vmor %vm591, %vm676
      %vm709 = vmor %vm592, %vm677
      %vm710 = vmor %vm593, %vm678
      %vm711 = vmor %vm594, %vm679
      %vm712 = vmor %vm595, %vm680
      %vm713 = vmor %vm596, %vm681
      %vm714 = vmor %vm597, %vm682
      %vm715 = vmor %vm598, %vm683
      %vm716 = vmor %vm599, %vm684
      %vm717 = vmor %vm600, %vm685
      %v718 = vld [vmem:[%s455] sm:$0xff]
      %v719 = vld [vmem:[%s455 + $0x8] sm:$0xff]
      %v720 = vld [vmem:[%s455 + $0x10] sm:$0xff]
      %v721 = vld [vmem:[%s455 + $0x18] sm:$0xff]
      %v722 = vld [vmem:[%s455 + $0x20] sm:$0xff]
      %v723 = vld [vmem:[%s455 + $0x28] sm:$0xff]
      %v724 = vld [vmem:[%s455 + $0x30] sm:$0xff]
      %v725 = vld [vmem:[%s455 + $0x38] sm:$0xff]
      %v726 = vld [vmem:[%s455 + $0x40] sm:$0xff]
      %v727 = vld [vmem:[%s455 + $0x48] sm:$0xff]
      %v728 = vld [vmem:[%s455 + $0x50] sm:$0xff]
      %v729 = vld [vmem:[%s455 + $0x58] sm:$0xff]
      %v730 = vld [vmem:[%s455 + $0x60] sm:$0xff]
      %v731 = vld [vmem:[%s455 + $0x68] sm:$0xff]
      %v732 = vld [vmem:[%s455 + $0x70] sm:$0xff]
      %v733 = vld [vmem:[%s455 + $0x78] sm:$0xff]
      %v734 = vld [vmem:[%s2] sm:$0x3]
      %736 = vset.pattern.permute.xlu0 0
      %737 = vperm.xlu0 %736, %v718
      %v738 = vpop.permute.xlu0 %737
      %741 = vset.pattern.permute.xlu0 0
      %742 = vperm.xlu0 %741, %v719
      %v743 = vpop.permute.xlu0 %742
      %746 = vset.pattern.permute.xlu0 0
      %747 = vperm.xlu0 %746, %v720
      %v748 = vpop.permute.xlu0 %747
      %751 = vset.pattern.permute.xlu0 0
      %752 = vperm.xlu0 %751, %v721
      %v753 = vpop.permute.xlu0 %752
      %756 = vset.pattern.permute.xlu0 0
      %757 = vperm.xlu0 %756, %v722
      %v758 = vpop.permute.xlu0 %757
      %761 = vset.pattern.permute.xlu0 0
      %762 = vperm.xlu0 %761, %v723
      %v763 = vpop.permute.xlu0 %762
      %766 = vset.pattern.permute.xlu0 0
      %767 = vperm.xlu0 %766, %v724
      %v768 = vpop.permute.xlu0 %767
      %771 = vset.pattern.permute.xlu0 0
      %772 = vperm.xlu0 %771, %v725
      %v773 = vpop.permute.xlu0 %772
      %776 = vset.pattern.permute.xlu0 0
      %777 = vperm.xlu0 %776, %v726
      %v778 = vpop.permute.xlu0 %777
      %781 = vset.pattern.permute.xlu0 0
      %782 = vperm.xlu0 %781, %v727
      %v783 = vpop.permute.xlu0 %782
      %786 = vset.pattern.permute.xlu0 0
      %787 = vperm.xlu0 %786, %v728
      %v788 = vpop.permute.xlu0 %787
      %791 = vset.pattern.permute.xlu0 0
      %792 = vperm.xlu0 %791, %v729
      %v793 = vpop.permute.xlu0 %792
      %796 = vset.pattern.permute.xlu0 0
      %797 = vperm.xlu0 %796, %v730
      %v798 = vpop.permute.xlu0 %797
      %801 = vset.pattern.permute.xlu0 0
      %802 = vperm.xlu0 %801, %v731
      %v803 = vpop.permute.xlu0 %802
      %806 = vset.pattern.permute.xlu0 0
      %807 = vperm.xlu0 %806, %v732
      %v808 = vpop.permute.xlu0 %807
      %811 = vset.pattern.permute.xlu0 0
      %812 = vperm.xlu0 %811, %v733
      %v813 = vpop.permute.xlu0 %812
      %v816 = vperm.slane %v734, 0
      %v817 = vperm.slane %v734, 1
      %v820 = vadd.f32 %v738, %v816
      %v821 = vadd.f32 %v738, %v817
      %v822 = vadd.f32 %v743, %v816
      %v823 = vadd.f32 %v743, %v817
      %v824 = vadd.f32 %v748, %v816
      %v825 = vadd.f32 %v748, %v817
      %v826 = vadd.f32 %v753, %v816
      %v827 = vadd.f32 %v753, %v817
      %v828 = vadd.f32 %v758, %v816
      %v829 = vadd.f32 %v758, %v817
      %v830 = vadd.f32 %v763, %v816
      %v831 = vadd.f32 %v763, %v817
      %v832 = vadd.f32 %v768, %v816
      %v833 = vadd.f32 %v768, %v817
      %v834 = vadd.f32 %v773, %v816
      %v835 = vadd.f32 %v773, %v817
      %v836 = vadd.f32 %v778, %v816
      %v837 = vadd.f32 %v778, %v817
      %v838 = vadd.f32 %v783, %v816
      %v839 = vadd.f32 %v783, %v817
      %v840 = vadd.f32 %v788, %v816
      %v841 = vadd.f32 %v788, %v817
      %v842 = vadd.f32 %v793, %v816
      %v843 = vadd.f32 %v793, %v817
      %v844 = vadd.f32 %v798, %v816
      %v845 = vadd.f32 %v798, %v817
      %v846 = vadd.f32 %v803, %v816
      %v847 = vadd.f32 %v803, %v817
      %v848 = vadd.f32 %v808, %v816
      %v849 = vadd.f32 %v808, %v817
      %v850 = vadd.f32 %v813, %v816
      %v851 = vadd.f32 %v813, %v817
      %vm852 = vcmp.gt.f32.partialorder %v820, 0.0
      %vm853 = vcmp.gt.f32.partialorder %v821, 0.0
      %vm854 = vcmp.gt.f32.partialorder %v822, 0.0
      %vm855 = vcmp.gt.f32.partialorder %v823, 0.0
      %vm856 = vcmp.gt.f32.partialorder %v824, 0.0
      %vm857 = vcmp.gt.f32.partialorder %v825, 0.0
      %vm858 = vcmp.gt.f32.partialorder %v826, 0.0
      %vm859 = vcmp.gt.f32.partialorder %v827, 0.0
      %vm860 = vcmp.gt.f32.partialorder %v828, 0.0
      %vm861 = vcmp.gt.f32.partialorder %v829, 0.0
      %vm862 = vcmp.gt.f32.partialorder %v830, 0.0
      %vm863 = vcmp.gt.f32.partialorder %v831, 0.0
      %vm864 = vcmp.gt.f32.partialorder %v832, 0.0
      %vm865 = vcmp.gt.f32.partialorder %v833, 0.0
      %vm866 = vcmp.gt.f32.partialorder %v834, 0.0
      %vm867 = vcmp.gt.f32.partialorder %v835, 0.0
      %vm868 = vcmp.gt.f32.partialorder %v836, 0.0
      %vm869 = vcmp.gt.f32.partialorder %v837, 0.0
      %vm870 = vcmp.gt.f32.partialorder %v838, 0.0
      %vm871 = vcmp.gt.f32.partialorder %v839, 0.0
      %vm872 = vcmp.gt.f32.partialorder %v840, 0.0
      %vm873 = vcmp.gt.f32.partialorder %v841, 0.0
      %vm874 = vcmp.gt.f32.partialorder %v842, 0.0
      %vm875 = vcmp.gt.f32.partialorder %v843, 0.0
      %vm876 = vcmp.gt.f32.partialorder %v844, 0.0
      %vm877 = vcmp.gt.f32.partialorder %v845, 0.0
      %vm878 = vcmp.gt.f32.partialorder %v846, 0.0
      %vm879 = vcmp.gt.f32.partialorder %v847, 0.0
      %vm880 = vcmp.gt.f32.partialorder %v848, 0.0
      %vm881 = vcmp.gt.f32.partialorder %v849, 0.0
      %vm882 = vcmp.gt.f32.partialorder %v850, 0.0
      %vm883 = vcmp.gt.f32.partialorder %v851, 0.0
      %v884 = vmul.f32 %v820, 0.2
      %v885 = vmul.f32 %v821, 0.2
      %v886 = vmul.f32 %v822, 0.2
      %v887 = vmul.f32 %v823, 0.2
      %v888 = vmul.f32 %v824, 0.2
      %v889 = vmul.f32 %v825, 0.2
      %v890 = vmul.f32 %v826, 0.2
      %v891 = vmul.f32 %v827, 0.2
      %v892 = vmul.f32 %v828, 0.2
      %v893 = vmul.f32 %v829, 0.2
      %v894 = vmul.f32 %v830, 0.2
      %v895 = vmul.f32 %v831, 0.2
      %v896 = vmul.f32 %v832, 0.2
      %v897 = vmul.f32 %v833, 0.2
      %v898 = vmul.f32 %v834, 0.2
      %v899 = vmul.f32 %v835, 0.2
      %v900 = vmul.f32 %v836, 0.2
      %v901 = vmul.f32 %v837, 0.2
      %v902 = vmul.f32 %v838, 0.2
      %v903 = vmul.f32 %v839, 0.2
      %v904 = vmul.f32 %v840, 0.2
      %v905 = vmul.f32 %v841, 0.2
      %v906 = vmul.f32 %v842, 0.2
      %v907 = vmul.f32 %v843, 0.2
      %v908 = vmul.f32 %v844, 0.2
      %v909 = vmul.f32 %v845, 0.2
      %v910 = vmul.f32 %v846, 0.2
      %v911 = vmul.f32 %v847, 0.2
      %v912 = vmul.f32 %v848, 0.2
      %v913 = vmul.f32 %v849, 0.2
      %v914 = vmul.f32 %v850, 0.2
      %v915 = vmul.f32 %v851, 0.2
      %v916 = vsel %vm852, %v820, %v884
      %v917 = vsel %vm853, %v821, %v885
      %v918 = vsel %vm854, %v822, %v886
      %v919 = vsel %vm855, %v823, %v887
      %v920 = vsel %vm856, %v824, %v888
      %v921 = vsel %vm857, %v825, %v889
      %v922 = vsel %vm858, %v826, %v890
      %v923 = vsel %vm859, %v827, %v891
      %v924 = vsel %vm860, %v828, %v892
      %v925 = vsel %vm861, %v829, %v893
      %v926 = vsel %vm862, %v830, %v894
      %v927 = vsel %vm863, %v831, %v895
      %v928 = vsel %vm864, %v832, %v896
      %v929 = vsel %vm865, %v833, %v897
      %v930 = vsel %vm866, %v834, %v898
      %v931 = vsel %vm867, %v835, %v899
      %v932 = vsel %vm868, %v836, %v900
      %v933 = vsel %vm869, %v837, %v901
      %v934 = vsel %vm870, %v838, %v902
      %v935 = vsel %vm871, %v839, %v903
      %v936 = vsel %vm872, %v840, %v904
      %v937 = vsel %vm873, %v841, %v905
      %v938 = vsel %vm874, %v842, %v906
      %v939 = vsel %vm875, %v843, %v907
      %v940 = vsel %vm876, %v844, %v908
      %v941 = vsel %vm877, %v845, %v909
      %v942 = vsel %vm878, %v846, %v910
      %v943 = vsel %vm879, %v847, %v911
      %v944 = vsel %vm880, %v848, %v912
      %v945 = vsel %vm881, %v849, %v913
      %v946 = vsel %vm882, %v850, %v914
      %v947 = vsel %vm883, %v851, %v915
      %v948 = vsel %vm686, %v916, -1e+30
      %v949 = vsel %vm687, %v917, -1e+30
      %v950 = vsel %vm688, %v918, -1e+30
      %v951 = vsel %vm689, %v919, -1e+30
      %v952 = vsel %vm690, %v920, -1e+30
      %v953 = vsel %vm691, %v921, -1e+30
      %v954 = vsel %vm692, %v922, -1e+30
      %v955 = vsel %vm693, %v923, -1e+30
      %v956 = vsel %vm694, %v924, -1e+30
      %v957 = vsel %vm695, %v925, -1e+30
      %v958 = vsel %vm696, %v926, -1e+30
      %v959 = vsel %vm697, %v927, -1e+30
      %v960 = vsel %vm698, %v928, -1e+30
      %v961 = vsel %vm699, %v929, -1e+30
      %v962 = vsel %vm700, %v930, -1e+30
      %v963 = vsel %vm701, %v931, -1e+30
      %v964 = vsel %vm702, %v932, -1e+30
      %v965 = vsel %vm703, %v933, -1e+30
      %v966 = vsel %vm704, %v934, -1e+30
      %v967 = vsel %vm705, %v935, -1e+30
      %v968 = vsel %vm706, %v936, -1e+30
      %v969 = vsel %vm707, %v937, -1e+30
      %v970 = vsel %vm708, %v938, -1e+30
      %v971 = vsel %vm709, %v939, -1e+30
      %v972 = vsel %vm710, %v940, -1e+30
      %v973 = vsel %vm711, %v941, -1e+30
      %v974 = vsel %vm712, %v942, -1e+30
      %v975 = vsel %vm713, %v943, -1e+30
      %v976 = vsel %vm714, %v944, -1e+30
      %v977 = vsel %vm715, %v945, -1e+30
      %v978 = vsel %vm716, %v946, -1e+30
      %v979 = vsel %vm717, %v947, -1e+30
      %v980 = vmax.f32 %v948, %v949
      %981 = vmax.xlane.f32.xlu0 %v980
      %v982 = vpop.xlane.xlu0 %981
      %v983 = vmax.f32 %v950, %v951
      %984 = vmax.xlane.f32.xlu0 %v983
      %v985 = vpop.xlane.xlu0 %984
      %v986 = vmax.f32 %v952, %v953
      %987 = vmax.xlane.f32.xlu0 %v986
      %v988 = vpop.xlane.xlu0 %987
      %v989 = vmax.f32 %v954, %v955
      %990 = vmax.xlane.f32.xlu0 %v989
      %v991 = vpop.xlane.xlu0 %990
      %v992 = vmax.f32 %v956, %v957
      %993 = vmax.xlane.f32.xlu0 %v992
      %v994 = vpop.xlane.xlu0 %993
      %v995 = vmax.f32 %v958, %v959
      %996 = vmax.xlane.f32.xlu0 %v995
      %v997 = vpop.xlane.xlu0 %996
      %v998 = vmax.f32 %v960, %v961
      %999 = vmax.xlane.f32.xlu0 %v998
      %v1000 = vpop.xlane.xlu0 %999
      %v1001 = vmax.f32 %v962, %v963
      %1002 = vmax.xlane.f32.xlu0 %v1001
      %v1003 = vpop.xlane.xlu0 %1002
      %v1004 = vmax.f32 %v964, %v965
      %1005 = vmax.xlane.f32.xlu0 %v1004
      %v1006 = vpop.xlane.xlu0 %1005
      %v1007 = vmax.f32 %v966, %v967
      %1008 = vmax.xlane.f32.xlu0 %v1007
      %v1009 = vpop.xlane.xlu0 %1008
      %v1010 = vmax.f32 %v968, %v969
      %1011 = vmax.xlane.f32.xlu0 %v1010
      %v1012 = vpop.xlane.xlu0 %1011
      %v1013 = vmax.f32 %v970, %v971
      %1014 = vmax.xlane.f32.xlu0 %v1013
      %v1015 = vpop.xlane.xlu0 %1014
      %v1016 = vmax.f32 %v972, %v973
      %1017 = vmax.xlane.f32.xlu0 %v1016
      %v1018 = vpop.xlane.xlu0 %1017
      %v1019 = vmax.f32 %v974, %v975
      %1020 = vmax.xlane.f32.xlu0 %v1019
      %v1021 = vpop.xlane.xlu0 %1020
      %v1022 = vmax.f32 %v976, %v977
      %1023 = vmax.xlane.f32.xlu0 %v1022
      %v1024 = vpop.xlane.xlu0 %1023
      %v1025 = vmax.f32 %v978, %v979
      %1026 = vmax.xlane.f32.xlu0 %v1025
      %v1027 = vpop.xlane.xlu0 %1026
      %v1028 = vsub.f32 %v948, %v982
      %v1029 = vsub.f32 %v949, %v982
      %v1030 = vsub.f32 %v950, %v985
      %v1031 = vsub.f32 %v951, %v985
      %v1032 = vsub.f32 %v952, %v988
      %v1033 = vsub.f32 %v953, %v988
      %v1034 = vsub.f32 %v954, %v991
      %v1035 = vsub.f32 %v955, %v991
      %v1036 = vsub.f32 %v956, %v994
      %v1037 = vsub.f32 %v957, %v994
      %v1038 = vsub.f32 %v958, %v997
      %v1039 = vsub.f32 %v959, %v997
      %v1040 = vsub.f32 %v960, %v1000
      %v1041 = vsub.f32 %v961, %v1000
      %v1042 = vsub.f32 %v962, %v1003
      %v1043 = vsub.f32 %v963, %v1003
      %v1044 = vsub.f32 %v964, %v1006
      %v1045 = vsub.f32 %v965, %v1006
      %v1046 = vsub.f32 %v966, %v1009
      %v1047 = vsub.f32 %v967, %v1009
      %v1048 = vsub.f32 %v968, %v1012
      %v1049 = vsub.f32 %v969, %v1012
      %v1050 = vsub.f32 %v970, %v1015
      %v1051 = vsub.f32 %v971, %v1015
      %v1052 = vsub.f32 %v972, %v1018
      %v1053 = vsub.f32 %v973, %v1018
      %v1054 = vsub.f32 %v974, %v1021
      %v1055 = vsub.f32 %v975, %v1021
      %v1056 = vsub.f32 %v976, %v1024
      %v1057 = vsub.f32 %v977, %v1024
      %v1058 = vsub.f32 %v978, %v1027
      %v1059 = vsub.f32 %v979, %v1027
      %v1060 = vmul.f32 %v1028, 1.442695
      %v1061 = vpow.pop %v1060
      %v1062 = vmul.f32 %v1029, 1.442695
      %v1063 = vpow.pop %v1062
      %v1064 = vmul.f32 %v1030, 1.442695
      %v1065 = vpow.pop %v1064
      %v1066 = vmul.f32 %v1031, 1.442695
      %v1067 = vpow.pop %v1066
      %v1068 = vmul.f32 %v1032, 1.442695
      %v1069 = vpow.pop %v1068
      %v1070 = vmul.f32 %v1033, 1.442695
      %v1071 = vpow.pop %v1070
      %v1072 = vmul.f32 %v1034, 1.442695
      %v1073 = vpow.pop %v1072
      %v1074 = vmul.f32 %v1035, 1.442695
      %v1075 = vpow.pop %v1074
      %v1076 = vmul.f32 %v1036, 1.442695
      %v1077 = vpow.pop %v1076
      %v1078 = vmul.f32 %v1037, 1.442695
      %v1079 = vpow.pop %v1078
      %v1080 = vmul.f32 %v1038, 1.442695
      %v1081 = vpow.pop %v1080
      %v1082 = vmul.f32 %v1039, 1.442695
      %v1083 = vpow.pop %v1082
      %v1084 = vmul.f32 %v1040, 1.442695
      %v1085 = vpow.pop %v1084
      %v1086 = vmul.f32 %v1041, 1.442695
      %v1087 = vpow.pop %v1086
      %v1088 = vmul.f32 %v1042, 1.442695
      %v1089 = vpow.pop %v1088
      %v1090 = vmul.f32 %v1043, 1.442695
      %v1091 = vpow.pop %v1090
      %v1092 = vmul.f32 %v1044, 1.442695
      %v1093 = vpow.pop %v1092
      %v1094 = vmul.f32 %v1045, 1.442695
      %v1095 = vpow.pop %v1094
      %v1096 = vmul.f32 %v1046, 1.442695
      %v1097 = vpow.pop %v1096
      %v1098 = vmul.f32 %v1047, 1.442695
      %v1099 = vpow.pop %v1098
      %v1100 = vmul.f32 %v1048, 1.442695
      %v1101 = vpow.pop %v1100
      %v1102 = vmul.f32 %v1049, 1.442695
      %v1103 = vpow.pop %v1102
      %v1104 = vmul.f32 %v1050, 1.442695
      %v1105 = vpow.pop %v1104
      %v1106 = vmul.f32 %v1051, 1.442695
      %v1107 = vpow.pop %v1106
      %v1108 = vmul.f32 %v1052, 1.442695
      %v1109 = vpow.pop %v1108
      %v1110 = vmul.f32 %v1053, 1.442695
      %v1111 = vpow.pop %v1110
      %v1112 = vmul.f32 %v1054, 1.442695
      %v1113 = vpow.pop %v1112
      %v1114 = vmul.f32 %v1055, 1.442695
      %v1115 = vpow.pop %v1114
      %v1116 = vmul.f32 %v1056, 1.442695
      %v1117 = vpow.pop %v1116
      %v1118 = vmul.f32 %v1057, 1.442695
      %v1119 = vpow.pop %v1118
      %v1120 = vmul.f32 %v1058, 1.442695
      %v1121 = vpow.pop %v1120
      %v1122 = vmul.f32 %v1059, 1.442695
      %v1123 = vpow.pop %v1122
      %v1124 = vadd.f32 %v1061, %v1063
      %1125 = vadd.xlane.f32.xlu0 %v1124
      %v1126 = vpop.xlane.xlu0 %1125
      %v1127 = vadd.f32 %v1065, %v1067
      %1128 = vadd.xlane.f32.xlu0 %v1127
      %v1129 = vpop.xlane.xlu0 %1128
      %v1130 = vadd.f32 %v1069, %v1071
      %1131 = vadd.xlane.f32.xlu0 %v1130
      %v1132 = vpop.xlane.xlu0 %1131
      %v1133 = vadd.f32 %v1073, %v1075
      %1134 = vadd.xlane.f32.xlu0 %v1133
      %v1135 = vpop.xlane.xlu0 %1134
      %v1136 = vadd.f32 %v1077, %v1079
      %1137 = vadd.xlane.f32.xlu0 %v1136
      %v1138 = vpop.xlane.xlu0 %1137
      %v1139 = vadd.f32 %v1081, %v1083
      %1140 = vadd.xlane.f32.xlu0 %v1139
      %v1141 = vpop.xlane.xlu0 %1140
      %v1142 = vadd.f32 %v1085, %v1087
      %1143 = vadd.xlane.f32.xlu0 %v1142
      %v1144 = vpop.xlane.xlu0 %1143
      %v1145 = vadd.f32 %v1089, %v1091
      %1146 = vadd.xlane.f32.xlu0 %v1145
      %v1147 = vpop.xlane.xlu0 %1146
      %v1148 = vadd.f32 %v1093, %v1095
      %1149 = vadd.xlane.f32.xlu0 %v1148
      %v1150 = vpop.xlane.xlu0 %1149
      %v1151 = vadd.f32 %v1097, %v1099
      %1152 = vadd.xlane.f32.xlu0 %v1151
      %v1153 = vpop.xlane.xlu0 %1152
      %v1154 = vadd.f32 %v1101, %v1103
      %1155 = vadd.xlane.f32.xlu0 %v1154
      %v1156 = vpop.xlane.xlu0 %1155
      %v1157 = vadd.f32 %v1105, %v1107
      %1158 = vadd.xlane.f32.xlu0 %v1157
      %v1159 = vpop.xlane.xlu0 %1158
      %v1160 = vadd.f32 %v1109, %v1111
      %1161 = vadd.xlane.f32.xlu0 %v1160
      %v1162 = vpop.xlane.xlu0 %1161
      %v1163 = vadd.f32 %v1113, %v1115
      %1164 = vadd.xlane.f32.xlu0 %v1163
      %v1165 = vpop.xlane.xlu0 %1164
      %v1166 = vadd.f32 %v1117, %v1119
      %1167 = vadd.xlane.f32.xlu0 %v1166
      %v1168 = vpop.xlane.xlu0 %1167
      %v1169 = vadd.f32 %v1121, %v1123
      %1170 = vadd.xlane.f32.xlu0 %v1169
      %v1171 = vpop.xlane.xlu0 %1170
      %v1172 = vpack.c.bf16 %v1065, %v1061
      %v1173 = vpack.c.bf16 %v1067, %v1063
      %v1174 = vpack.c.bf16 %v1073, %v1069
      %v1175 = vpack.c.bf16 %v1075, %v1071
      %v1176 = vpack.c.bf16 %v1081, %v1077
      %v1177 = vpack.c.bf16 %v1083, %v1079
      %v1178 = vpack.c.bf16 %v1089, %v1085
      %v1179 = vpack.c.bf16 %v1091, %v1087
      %v1180 = vpack.c.bf16 %v1097, %v1093
      %v1181 = vpack.c.bf16 %v1099, %v1095
      %v1182 = vpack.c.bf16 %v1105, %v1101
      %v1183 = vpack.c.bf16 %v1107, %v1103
      %v1184 = vpack.c.bf16 %v1113, %v1109
      %v1185 = vpack.c.bf16 %v1115, %v1111
      %v1186 = vpack.c.bf16 %v1121, %v1117
      %v1187 = vpack.c.bf16 %v1123, %v1119
      %v1188 = vld [vmem:[%s5] sm:$0xf]
      %v1189 = vld [vmem:[%s5 + $0x4] sm:$0xf]
      %v1190 = vld [vmem:[%s5 + $0x8] sm:$0xf]
      %v1191 = vld [vmem:[%s5 + $0xc] sm:$0xf]
      %v1192 = vld [vmem:[%s5 + $0x10] sm:$0xf]
      %v1193 = vld [vmem:[%s5 + $0x14] sm:$0xf]
      %v1194 = vld [vmem:[%s5 + $0x18] sm:$0xf]
      %v1195 = vld [vmem:[%s5 + $0x1c] sm:$0xf]
      %v1196 = vld [vmem:[%s5 + $0x20] sm:$0xf]
      %v1197 = vld [vmem:[%s5 + $0x24] sm:$0xf]
      %v1198 = vld [vmem:[%s5 + $0x28] sm:$0xf]
      %v1199 = vld [vmem:[%s5 + $0x2c] sm:$0xf]
      %v1200 = vld [vmem:[%s5 + $0x30] sm:$0xf]
      %v1201 = vld [vmem:[%s5 + $0x34] sm:$0xf]
      %v1202 = vld [vmem:[%s5 + $0x38] sm:$0xf]
      %v1203 = vld [vmem:[%s5 + $0x3c] sm:$0xf]
      %v1204 = vld [vmem:[%s5 + $0x40] sm:$0xf]
      %v1205 = vld [vmem:[%s5 + $0x44] sm:$0xf]
      %v1206 = vld [vmem:[%s5 + $0x48] sm:$0xf]
      %v1207 = vld [vmem:[%s5 + $0x4c] sm:$0xf]
      %v1208 = vld [vmem:[%s5 + $0x50] sm:$0xf]
      %v1209 = vld [vmem:[%s5 + $0x54] sm:$0xf]
      %v1210 = vld [vmem:[%s5 + $0x58] sm:$0xf]
      %v1211 = vld [vmem:[%s5 + $0x5c] sm:$0xf]
      %v1212 = vld [vmem:[%s5 + $0x60] sm:$0xf]
      %v1213 = vld [vmem:[%s5 + $0x64] sm:$0xf]
      %v1214 = vld [vmem:[%s5 + $0x68] sm:$0xf]
      %v1215 = vld [vmem:[%s5 + $0x6c] sm:$0xf]
      %v1216 = vld [vmem:[%s5 + $0x70] sm:$0xf]
      %v1217 = vld [vmem:[%s5 + $0x74] sm:$0xf]
      %v1218 = vld [vmem:[%s5 + $0x78] sm:$0xf]
      %v1219 = vld [vmem:[%s5 + $0x7c] sm:$0xf]
      %v1252 = vunpack.c.l.b16 %v1188
      %v1253 = vunpack.c.l.b16 %v1189
      %v1254 = vunpack.c.l.b16 %v1190
      %v1255 = vunpack.c.l.b16 %v1191
      %v1256 = vunpack.c.l.b16 %v1192
      %v1257 = vunpack.c.l.b16 %v1193
      %v1258 = vunpack.c.l.b16 %v1194
      %v1259 = vunpack.c.l.b16 %v1195
      %v1260 = vunpack.c.l.b16 %v1196
      %v1261 = vunpack.c.l.b16 %v1197
      %v1262 = vunpack.c.l.b16 %v1198
      %v1263 = vunpack.c.l.b16 %v1199
      %v1264 = vunpack.c.l.b16 %v1200
      %v1265 = vunpack.c.l.b16 %v1201
      %v1266 = vunpack.c.l.b16 %v1202
      %v1267 = vunpack.c.l.b16 %v1203
      %v1268 = vunpack.c.l.b16 %v1204
      %v1269 = vunpack.c.l.b16 %v1205
      %v1270 = vunpack.c.l.b16 %v1206
      %v1271 = vunpack.c.l.b16 %v1207
      %v1272 = vunpack.c.l.b16 %v1208
      %v1273 = vunpack.c.l.b16 %v1209
      %v1274 = vunpack.c.l.b16 %v1210
      %v1275 = vunpack.c.l.b16 %v1211
      %v1276 = vunpack.c.l.b16 %v1212
      %v1277 = vunpack.c.l.b16 %v1213
      %v1278 = vunpack.c.l.b16 %v1214
      %v1279 = vunpack.c.l.b16 %v1215
      %v1280 = vunpack.c.l.b16 %v1216
      %v1281 = vunpack.c.l.b16 %v1217
      %v1282 = vunpack.c.l.b16 %v1218
      %v1283 = vunpack.c.l.b16 %v1219
      %v1284 = vpack.c.b16 %v1253, %v1252
      %v1285 = vpack.c.b16 %v1255, %v1254
      %v1286 = vpack.c.b16 %v1257, %v1256
      %v1287 = vpack.c.b16 %v1259, %v1258
      %v1288 = vpack.c.b16 %v1261, %v1260
      %v1289 = vpack.c.b16 %v1263, %v1262
      %v1290 = vpack.c.b16 %v1265, %v1264
      %v1291 = vpack.c.b16 %v1267, %v1266
      %v1292 = vpack.c.b16 %v1269, %v1268
      %v1293 = vpack.c.b16 %v1271, %v1270
      %v1294 = vpack.c.b16 %v1273, %v1272
      %v1295 = vpack.c.b16 %v1275, %v1274
      %v1296 = vpack.c.b16 %v1277, %v1276
      %v1297 = vpack.c.b16 %v1279, %v1278
      %v1298 = vpack.c.b16 %v1281, %v1280
      %v1299 = vpack.c.b16 %v1283, %v1282
      %1316 = vmatpush.bf16.msra.mxu0 %v1291
      %1317 = vmatpush.bf16.msra.mxu0 %v1290
      %1318 = vmatpush.bf16.msra.mxu0 %v1289
      %1319 = vmatpush.bf16.msra.mxu0 %v1288
      %1320 = vmatpush.bf16.msra.mxu0 %v1287
      %1321 = vmatpush.bf16.msra.mxu0 %v1286
      %1322 = vmatpush.bf16.msra.mxu0 %v1285
      %1323 = vmatpush.bf16.msra.mxu0 %v1284
      %1324 = vmatmul.bf16.gmra.mxu0 %v1172
      %v1325 = vpop.f32.mrf.mxu0
      %v1326 = vadd.f32 0.0, %v1325
      %v1327 = vpop.f32.mrf.mxu0
      %v1328 = vadd.f32 0.0, %v1327
      %1329 = vmatmul.bf16.gmra.mxu0 %v1174
      %v1330 = vpop.f32.mrf.mxu0
      %v1331 = vadd.f32 0.0, %v1330
      %v1332 = vpop.f32.mrf.mxu0
      %v1333 = vadd.f32 0.0, %v1332
      %1334 = vmatmul.bf16.gmra.mxu0 %v1176
      %v1335 = vpop.f32.mrf.mxu0
      %v1336 = vadd.f32 0.0, %v1335
      %v1337 = vpop.f32.mrf.mxu0
      %v1338 = vadd.f32 0.0, %v1337
      %1339 = vmatmul.bf16.gmra.mxu0 %v1178
      %v1340 = vpop.f32.mrf.mxu0
      %v1341 = vadd.f32 0.0, %v1340
      %v1342 = vpop.f32.mrf.mxu0
      %v1343 = vadd.f32 0.0, %v1342
      %1344 = vmatmul.bf16.gmra.mxu0 %v1180
      %v1345 = vpop.f32.mrf.mxu0
      %v1346 = vadd.f32 0.0, %v1345
      %v1347 = vpop.f32.mrf.mxu0
      %v1348 = vadd.f32 0.0, %v1347
      %1349 = vmatmul.bf16.gmra.mxu0 %v1182
      %v1350 = vpop.f32.mrf.mxu0
      %v1351 = vadd.f32 0.0, %v1350
      %v1352 = vpop.f32.mrf.mxu0
      %v1353 = vadd.f32 0.0, %v1352
      %1354 = vmatmul.bf16.gmra.mxu0 %v1184
      %v1355 = vpop.f32.mrf.mxu0
      %v1356 = vadd.f32 0.0, %v1355
      %v1357 = vpop.f32.mrf.mxu0
      %v1358 = vadd.f32 0.0, %v1357
      %1359 = vmatmul.bf16.gmra.mxu0 %v1186
      %v1360 = vpop.f32.mrf.mxu0
      %v1361 = vadd.f32 0.0, %v1360
      %v1362 = vpop.f32.mrf.mxu0
      %v1363 = vadd.f32 0.0, %v1362
      %1364 = vdwg.mxu0
      %1365 = vmatpush.bf16.msra.mxu0 %v1299
      %1366 = vmatpush.bf16.msra.mxu0 %v1298
      %1367 = vmatpush.bf16.msra.mxu0 %v1297
      %1368 = vmatpush.bf16.msra.mxu0 %v1296
      %1369 = vmatpush.bf16.msra.mxu0 %v1295
      %1370 = vmatpush.bf16.msra.mxu0 %v1294
      %1371 = vmatpush.bf16.msra.mxu0 %v1293
      %1372 = vmatpush.bf16.msra.mxu0 %v1292
      %1373 = vmatmul.bf16.gmra.mxu0 %v1173
      %v1374 = vpop.f32.mrf.mxu0
      %v1375 = vadd.f32 %v1326, %v1374
      %v1376 = vpop.f32.mrf.mxu0
      %v1377 = vadd.f32 %v1328, %v1376
      %1378 = vmatmul.bf16.gmra.mxu0 %v1175
      %v1379 = vpop.f32.mrf.mxu0
      %v1380 = vadd.f32 %v1331, %v1379
      %v1381 = vpop.f32.mrf.mxu0
      %v1382 = vadd.f32 %v1333, %v1381
      %1383 = vmatmul.bf16.gmra.mxu0 %v1177
      %v1384 = vpop.f32.mrf.mxu0
      %v1385 = vadd.f32 %v1336, %v1384
      %v1386 = vpop.f32.mrf.mxu0
      %v1387 = vadd.f32 %v1338, %v1386
      %1388 = vmatmul.bf16.gmra.mxu0 %v1179
      %v1389 = vpop.f32.mrf.mxu0
      %v1390 = vadd.f32 %v1341, %v1389
      %v1391 = vpop.f32.mrf.mxu0
      %v1392 = vadd.f32 %v1343, %v1391
      %1393 = vmatmul.bf16.gmra.mxu0 %v1181
      %v1394 = vpop.f32.mrf.mxu0
      %v1395 = vadd.f32 %v1346, %v1394
      %v1396 = vpop.f32.mrf.mxu0
      %v1397 = vadd.f32 %v1348, %v1396
      %1398 = vmatmul.bf16.gmra.mxu0 %v1183
      %v1399 = vpop.f32.mrf.mxu0
      %v1400 = vadd.f32 %v1351, %v1399
      %v1401 = vpop.f32.mrf.mxu0
      %v1402 = vadd.f32 %v1353, %v1401
      %1403 = vmatmul.bf16.gmra.mxu0 %v1185
      %v1404 = vpop.f32.mrf.mxu0
      %v1405 = vadd.f32 %v1356, %v1404
      %v1406 = vpop.f32.mrf.mxu0
      %v1407 = vadd.f32 %v1358, %v1406
      %1408 = vmatmul.bf16.gmra.mxu0 %v1187
      %v1409 = vpop.f32.mrf.mxu0
      %v1410 = vadd.f32 %v1361, %v1409
      %v1411 = vpop.f32.mrf.mxu0
      %v1412 = vadd.f32 %v1363, %v1411
      %1413 = vdwg.mxu0
      %v1414 = vrcp.pop %v1126
      %v1415 = vrcp.pop %v1129
      %v1416 = vrcp.pop %v1132
      %v1417 = vrcp.pop %v1135
      %v1418 = vrcp.pop %v1138
      %v1419 = vrcp.pop %v1141
      %v1420 = vrcp.pop %v1144
      %v1421 = vrcp.pop %v1147
      %v1422 = vrcp.pop %v1150
      %v1423 = vrcp.pop %v1153
      %v1424 = vrcp.pop %v1156
      %v1425 = vrcp.pop %v1159
      %v1426 = vrcp.pop %v1162
      %v1427 = vrcp.pop %v1165
      %v1428 = vrcp.pop %v1168
      %v1429 = vrcp.pop %v1171
      %v1430 = vmul.f32 %v1375, %v1414
      %v1431 = vmul.f32 %v1377, %v1415
      %v1432 = vmul.f32 %v1380, %v1416
      %v1433 = vmul.f32 %v1382, %v1417
      %v1434 = vmul.f32 %v1385, %v1418
      %v1435 = vmul.f32 %v1387, %v1419
      %v1436 = vmul.f32 %v1390, %v1420
      %v1437 = vmul.f32 %v1392, %v1421
      %v1438 = vmul.f32 %v1395, %v1422
      %v1439 = vmul.f32 %v1397, %v1423
      %v1440 = vmul.f32 %v1400, %v1424
      %v1441 = vmul.f32 %v1402, %v1425
      %v1442 = vmul.f32 %v1405, %v1426
      %v1443 = vmul.f32 %v1407, %v1427
      %v1444 = vmul.f32 %v1410, %v1428
      %v1445 = vmul.f32 %v1412, %v1429
      %v1446 = vld [vmem:[%s8] sm:$0x1]
      %v1448 = vperm.slane %v1446, 0
      %v1450 = vadd.f32 %v1430, %v1448
      %v1451 = vadd.f32 %v1431, %v1448
      %v1452 = vadd.f32 %v1432, %v1448
      %v1453 = vadd.f32 %v1433, %v1448
      %v1454 = vadd.f32 %v1434, %v1448
      %v1455 = vadd.f32 %v1435, %v1448
      %v1456 = vadd.f32 %v1436, %v1448
      %v1457 = vadd.f32 %v1437, %v1448
      %v1458 = vadd.f32 %v1438, %v1448
      %v1459 = vadd.f32 %v1439, %v1448
      %v1460 = vadd.f32 %v1440, %v1448
      %v1461 = vadd.f32 %v1441, %v1448
      %v1462 = vadd.f32 %v1442, %v1448
      %v1463 = vadd.f32 %v1443, %v1448
      %v1464 = vadd.f32 %v1444, %v1448
      %v1465 = vadd.f32 %v1445, %v1448
      %v1466 = vtanh.pop %v1450
      %v1467 = vtanh.pop %v1451
      %v1468 = vtanh.pop %v1452
      %v1469 = vtanh.pop %v1453
      %v1470 = vtanh.pop %v1454
      %v1471 = vtanh.pop %v1455
      %v1472 = vtanh.pop %v1456
      %v1473 = vtanh.pop %v1457
      %v1474 = vtanh.pop %v1458
      %v1475 = vtanh.pop %v1459
      %v1476 = vtanh.pop %v1460
      %v1477 = vtanh.pop %v1461
      %v1478 = vtanh.pop %v1462
      %v1479 = vtanh.pop %v1463
      %v1480 = vtanh.pop %v1464
      %v1481 = vtanh.pop %v1465
      %v1482 = vld [vmem:[%s467] sm:$0xff]
      %v1483 = vld [vmem:[%s467 + $0x8] sm:$0xff]
      %v1484 = vld [vmem:[%s467 + $0x10] sm:$0xff]
      %v1485 = vld [vmem:[%s467 + $0x18] sm:$0xff]
      %v1486 = vld [vmem:[%s467 + $0x20] sm:$0xff]
      %v1487 = vld [vmem:[%s467 + $0x28] sm:$0xff]
      %v1488 = vld [vmem:[%s467 + $0x30] sm:$0xff]
      %v1489 = vld [vmem:[%s467 + $0x38] sm:$0xff]
      %v1490 = vld [vmem:[%s467 + $0x40] sm:$0xff]
      %v1491 = vld [vmem:[%s467 + $0x48] sm:$0xff]
      %v1492 = vld [vmem:[%s467 + $0x50] sm:$0xff]
      %v1493 = vld [vmem:[%s467 + $0x58] sm:$0xff]
      %v1494 = vld [vmem:[%s467 + $0x60] sm:$0xff]
      %v1495 = vld [vmem:[%s467 + $0x68] sm:$0xff]
      %v1496 = vld [vmem:[%s467 + $0x70] sm:$0xff]
      %v1497 = vld [vmem:[%s467 + $0x78] sm:$0xff]
      %vm1498 = vcmask 261120
      %v1499 = vsel %vm1498, %v1466, %v1482
      %v1500 = vsel %vm1498, %v1467, %v1483
      %v1501 = vsel %vm1498, %v1468, %v1484
      %v1502 = vsel %vm1498, %v1469, %v1485
      %v1503 = vsel %vm1498, %v1470, %v1486
      %v1504 = vsel %vm1498, %v1471, %v1487
      %v1505 = vsel %vm1498, %v1472, %v1488
      %v1506 = vsel %vm1498, %v1473, %v1489
      %v1507 = vsel %vm1498, %v1474, %v1490
      %v1508 = vsel %vm1498, %v1475, %v1491
      %v1509 = vsel %vm1498, %v1476, %v1492
      %v1510 = vsel %vm1498, %v1477, %v1493
      %v1511 = vsel %vm1498, %v1478, %v1494
      %v1512 = vsel %vm1498, %v1479, %v1495
      %v1513 = vsel %vm1498, %v1480, %v1496
      %v1514 = vsel %vm1498, %v1481, %v1497
      %v1515 = vld [vmem:[%s9] sm:$0xff]
      %v1516 = vld [vmem:[%s9 + $0x8] sm:$0xff]
      %v1517 = vld [vmem:[%s9 + $0x10] sm:$0xff]
      %v1518 = vld [vmem:[%s9 + $0x18] sm:$0xff]
      %v1519 = vld [vmem:[%s9 + $0x20] sm:$0xff]
      %v1520 = vld [vmem:[%s9 + $0x28] sm:$0xff]
      %v1521 = vld [vmem:[%s9 + $0x30] sm:$0xff]
      %v1522 = vld [vmem:[%s9 + $0x38] sm:$0xff]
      %v1523 = vld [vmem:[%s10] sm:$0x1]
      %v1525 = vperm.slane %v1523, 0
      %vm1527 = vcmask 523264
      %v1529 = vsel %vm1527, %v1499, 0
      %v1532 = vsel %vm1527, %v1500, 0
      %v1535 = vsel %vm1527, %v1501, 0
      %v1538 = vsel %vm1527, %v1502, 0
      %v1541 = vsel %vm1527, %v1503, 0
      %v1544 = vsel %vm1527, %v1504, 0
      %v1547 = vsel %vm1527, %v1505, 0
      %v1550 = vsel %vm1527, %v1506, 0
      %v1553 = vsel %vm1527, %v1507, 0
      %v1556 = vsel %vm1527, %v1508, 0
      %v1559 = vsel %vm1527, %v1509, 0
      %v1562 = vsel %vm1527, %v1510, 0
      %v1565 = vsel %vm1527, %v1511, 0
      %v1568 = vsel %vm1527, %v1512, 0
      %v1571 = vsel %vm1527, %v1513, 0
      %v1574 = vsel %vm1527, %v1514, 0
      %1576 = vmatpush.msra.mxu0 0.0
      %1577 = vmatpush.msra.mxu0 0.0
      %1578 = vmatpush.msra.mxu0 0.0
      %1579 = vmatpush.msra.mxu0 0.0
      %1580 = vmatpush.msra.mxu0 0.0
      %1581 = vmatpush.msra.mxu0 0.0
      %1582 = vmatpush.msra.mxu0 0.0
      %1583 = vmatpush.msra.mxu0 0.0
      %1584 = vmatpush.msra.mxu0 %v1522
      %1585 = vmatpush.msra.mxu0 %v1521
      %1586 = vmatpush.msra.mxu0 %v1520
      %1587 = vmatpush.msra.mxu0 %v1519
      %1588 = vmatpush.msra.mxu0 %v1518
      %1589 = vmatpush.msra.mxu0 %v1517
      %1590 = vmatpush.msra.mxu0 %v1516
      %1591 = vmatpush.msra.mxu0 %v1515
      %1592 = vmatmul.f32.gmra.mxu0 %v1529
      %v1593 = vpop.f32.mrf.mxu0
      %v1594 = vadd.f32 %v1525, %v1593
      %1595 = vmatmul.f32.gmra.mxu0 %v1532
      %v1596 = vpop.f32.mrf.mxu0
      %v1597 = vadd.f32 %v1525, %v1596
      %1598 = vmatmul.f32.gmra.mxu0 %v1535
      %v1599 = vpop.f32.mrf.mxu0
      %v1600 = vadd.f32 %v1525, %v1599
      %1601 = vmatmul.f32.gmra.mxu0 %v1538
      %v1602 = vpop.f32.mrf.mxu0
      %v1603 = vadd.f32 %v1525, %v1602
      %1604 = vmatmul.f32.gmra.mxu0 %v1541
      %v1605 = vpop.f32.mrf.mxu0
      %v1606 = vadd.f32 %v1525, %v1605
      %1607 = vmatmul.f32.gmra.mxu0 %v1544
      %v1608 = vpop.f32.mrf.mxu0
      %v1609 = vadd.f32 %v1525, %v1608
      %1610 = vmatmul.f32.gmra.mxu0 %v1547
      %v1611 = vpop.f32.mrf.mxu0
      %v1612 = vadd.f32 %v1525, %v1611
      %1613 = vmatmul.f32.gmra.mxu0 %v1550
      %v1614 = vpop.f32.mrf.mxu0
      %v1615 = vadd.f32 %v1525, %v1614
      %1616 = vmatmul.f32.gmra.mxu0 %v1553
      %v1617 = vpop.f32.mrf.mxu0
      %v1618 = vadd.f32 %v1525, %v1617
      %1619 = vmatmul.f32.gmra.mxu0 %v1556
      %v1620 = vpop.f32.mrf.mxu0
      %v1621 = vadd.f32 %v1525, %v1620
      %1622 = vmatmul.f32.gmra.mxu0 %v1559
      %v1623 = vpop.f32.mrf.mxu0
      %v1624 = vadd.f32 %v1525, %v1623
      %1625 = vmatmul.f32.gmra.mxu0 %v1562
      %v1626 = vpop.f32.mrf.mxu0
      %v1627 = vadd.f32 %v1525, %v1626
      %1628 = vmatmul.f32.gmra.mxu0 %v1565
      %v1629 = vpop.f32.mrf.mxu0
      %v1630 = vadd.f32 %v1525, %v1629
      %1631 = vmatmul.f32.gmra.mxu0 %v1568
      %v1632 = vpop.f32.mrf.mxu0
      %v1633 = vadd.f32 %v1525, %v1632
      %1634 = vmatmul.f32.gmra.mxu0 %v1571
      %v1635 = vpop.f32.mrf.mxu0
      %v1636 = vadd.f32 %v1525, %v1635
      %1637 = vmatmul.f32.gmra.mxu0 %v1574
      %v1638 = vpop.f32.mrf.mxu0
      %v1639 = vadd.f32 %v1525, %v1638
      %1640 = vdwg.mxu0
      %v1641 = vxor.u32 %v1594, 2147483648
      %v1642 = vxor.u32 %v1597, 2147483648
      %v1643 = vxor.u32 %v1600, 2147483648
      %v1644 = vxor.u32 %v1603, 2147483648
      %v1645 = vxor.u32 %v1606, 2147483648
      %v1646 = vxor.u32 %v1609, 2147483648
      %v1647 = vxor.u32 %v1612, 2147483648
      %v1648 = vxor.u32 %v1615, 2147483648
      %v1649 = vxor.u32 %v1618, 2147483648
      %v1650 = vxor.u32 %v1621, 2147483648
      %v1651 = vxor.u32 %v1624, 2147483648
      %v1652 = vxor.u32 %v1627, 2147483648
      %v1653 = vxor.u32 %v1630, 2147483648
      %v1654 = vxor.u32 %v1633, 2147483648
      %v1655 = vxor.u32 %v1636, 2147483648
      %v1656 = vxor.u32 %v1639, 2147483648
      %v1657 = vmul.f32 %v1641, 1.442695
      %v1658 = vpow.pop %v1657
      %v1659 = vmul.f32 %v1642, 1.442695
      %v1660 = vpow.pop %v1659
      %v1661 = vmul.f32 %v1643, 1.442695
      %v1662 = vpow.pop %v1661
      %v1663 = vmul.f32 %v1644, 1.442695
      %v1664 = vpow.pop %v1663
      %v1665 = vmul.f32 %v1645, 1.442695
      %v1666 = vpow.pop %v1665
      %v1667 = vmul.f32 %v1646, 1.442695
      %v1668 = vpow.pop %v1667
      %v1669 = vmul.f32 %v1647, 1.442695
      %v1670 = vpow.pop %v1669
      %v1671 = vmul.f32 %v1648, 1.442695
      %v1672 = vpow.pop %v1671
      %v1673 = vmul.f32 %v1649, 1.442695
      %v1674 = vpow.pop %v1673
      %v1675 = vmul.f32 %v1650, 1.442695
      %v1676 = vpow.pop %v1675
      %v1677 = vmul.f32 %v1651, 1.442695
      %v1678 = vpow.pop %v1677
      %v1679 = vmul.f32 %v1652, 1.442695
      %v1680 = vpow.pop %v1679
      %v1681 = vmul.f32 %v1653, 1.442695
      %v1682 = vpow.pop %v1681
      %v1683 = vmul.f32 %v1654, 1.442695
      %v1684 = vpow.pop %v1683
      %v1685 = vmul.f32 %v1655, 1.442695
      %v1686 = vpow.pop %v1685
      %v1687 = vmul.f32 %v1656, 1.442695
      %v1688 = vpow.pop %v1687
      %v1689 = vadd.f32 %v1658, 1.0
      %v1690 = vadd.f32 %v1660, 1.0
      %v1691 = vadd.f32 %v1662, 1.0
      %v1692 = vadd.f32 %v1664, 1.0
      %v1693 = vadd.f32 %v1666, 1.0
      %v1694 = vadd.f32 %v1668, 1.0
      %v1695 = vadd.f32 %v1670, 1.0
      %v1696 = vadd.f32 %v1672, 1.0
      %v1697 = vadd.f32 %v1674, 1.0
      %v1698 = vadd.f32 %v1676, 1.0
      %v1699 = vadd.f32 %v1678, 1.0
      %v1700 = vadd.f32 %v1680, 1.0
      %v1701 = vadd.f32 %v1682, 1.0
      %v1702 = vadd.f32 %v1684, 1.0
      %v1703 = vadd.f32 %v1686, 1.0
      %v1704 = vadd.f32 %v1688, 1.0
      %v1705 = vrcp.pop %v1689
      %v1706 = vmul.f32 %v1689, %v1705
      %v1707 = vsub.f32 1.0, %v1706
      %v1708 = vmul.f32 %v1705, %v1707
      %v1709 = vadd.f32 %v1705, %v1708
      %vm1710 = vweird.f32 %v1689
      %vm1711 = vweird.f32 %v1705
      %vm1712 = vmor %vm1710, %vm1711
      %v1713 = vsel %vm1712, %v1705, %v1709
      %v1714 = vand.u32 2147483647, %v1689
      %vm1715 = vcmp.eq.f32.partialorder %v1714, 8.507059e+37
      %v1716 = vand.u32 %v1689, 2147483648
      %v1717 = vor.u32 1.1754944e-38, %v1716
      %v1718 = vsel %vm1715, %v1717, %v1713
      %v1719 = vmul.f32 1.0, %v1718
      %v1720 = vrcp.pop %v1690
      %v1721 = vmul.f32 %v1690, %v1720
      %v1722 = vsub.f32 1.0, %v1721
      %v1723 = vmul.f32 %v1720, %v1722
      %v1724 = vadd.f32 %v1720, %v1723
      %vm1725 = vweird.f32 %v1690
      %vm1726 = vweird.f32 %v1720
      %vm1727 = vmor %vm1725, %vm1726
      %v1728 = vsel %vm1727, %v1720, %v1724
      %v1729 = vand.u32 2147483647, %v1690
      %vm1730 = vcmp.eq.f32.partialorder %v1729, 8.507059e+37
      %v1731 = vand.u32 %v1690, 2147483648
      %v1732 = vor.u32 1.1754944e-38, %v1731
      %v1733 = vsel %vm1730, %v1732, %v1728
      %v1734 = vmul.f32 1.0, %v1733
      %v1735 = vrcp.pop %v1691
      %v1736 = vmul.f32 %v1691, %v1735
      %v1737 = vsub.f32 1.0, %v1736
      %v1738 = vmul.f32 %v1735, %v1737
      %v1739 = vadd.f32 %v1735, %v1738
      %vm1740 = vweird.f32 %v1691
      %vm1741 = vweird.f32 %v1735
      %vm1742 = vmor %vm1740, %vm1741
      %v1743 = vsel %vm1742, %v1735, %v1739
      %v1744 = vand.u32 2147483647, %v1691
      %vm1745 = vcmp.eq.f32.partialorder %v1744, 8.507059e+37
      %v1746 = vand.u32 %v1691, 2147483648
      %v1747 = vor.u32 1.1754944e-38, %v1746
      %v1748 = vsel %vm1745, %v1747, %v1743
      %v1749 = vmul.f32 1.0, %v1748
      %v1750 = vrcp.pop %v1692
      %v1751 = vmul.f32 %v1692, %v1750
      %v1752 = vsub.f32 1.0, %v1751
      %v1753 = vmul.f32 %v1750, %v1752
      %v1754 = vadd.f32 %v1750, %v1753
      %vm1755 = vweird.f32 %v1692
      %vm1756 = vweird.f32 %v1750
      %vm1757 = vmor %vm1755, %vm1756
      %v1758 = vsel %vm1757, %v1750, %v1754
      %v1759 = vand.u32 2147483647, %v1692
      %vm1760 = vcmp.eq.f32.partialorder %v1759, 8.507059e+37
      %v1761 = vand.u32 %v1692, 2147483648
      %v1762 = vor.u32 1.1754944e-38, %v1761
      %v1763 = vsel %vm1760, %v1762, %v1758
      %v1764 = vmul.f32 1.0, %v1763
      %v1765 = vrcp.pop %v1693
      %v1766 = vmul.f32 %v1693, %v1765
      %v1767 = vsub.f32 1.0, %v1766
      %v1768 = vmul.f32 %v1765, %v1767
      %v1769 = vadd.f32 %v1765, %v1768
      %vm1770 = vweird.f32 %v1693
      %vm1771 = vweird.f32 %v1765
      %vm1772 = vmor %vm1770, %vm1771
      %v1773 = vsel %vm1772, %v1765, %v1769
      %v1774 = vand.u32 2147483647, %v1693
      %vm1775 = vcmp.eq.f32.partialorder %v1774, 8.507059e+37
      %v1776 = vand.u32 %v1693, 2147483648
      %v1777 = vor.u32 1.1754944e-38, %v1776
      %v1778 = vsel %vm1775, %v1777, %v1773
      %v1779 = vmul.f32 1.0, %v1778
      %v1780 = vrcp.pop %v1694
      %v1781 = vmul.f32 %v1694, %v1780
      %v1782 = vsub.f32 1.0, %v1781
      %v1783 = vmul.f32 %v1780, %v1782
      %v1784 = vadd.f32 %v1780, %v1783
      %vm1785 = vweird.f32 %v1694
      %vm1786 = vweird.f32 %v1780
      %vm1787 = vmor %vm1785, %vm1786
      %v1788 = vsel %vm1787, %v1780, %v1784
      %v1789 = vand.u32 2147483647, %v1694
      %vm1790 = vcmp.eq.f32.partialorder %v1789, 8.507059e+37
      %v1791 = vand.u32 %v1694, 2147483648
      %v1792 = vor.u32 1.1754944e-38, %v1791
      %v1793 = vsel %vm1790, %v1792, %v1788
      %v1794 = vmul.f32 1.0, %v1793
      %v1795 = vrcp.pop %v1695
      %v1796 = vmul.f32 %v1695, %v1795
      %v1797 = vsub.f32 1.0, %v1796
      %v1798 = vmul.f32 %v1795, %v1797
      %v1799 = vadd.f32 %v1795, %v1798
      %vm1800 = vweird.f32 %v1695
      %vm1801 = vweird.f32 %v1795
      %vm1802 = vmor %vm1800, %vm1801
      %v1803 = vsel %vm1802, %v1795, %v1799
      %v1804 = vand.u32 2147483647, %v1695
      %vm1805 = vcmp.eq.f32.partialorder %v1804, 8.507059e+37
      %v1806 = vand.u32 %v1695, 2147483648
      %v1807 = vor.u32 1.1754944e-38, %v1806
      %v1808 = vsel %vm1805, %v1807, %v1803
      %v1809 = vmul.f32 1.0, %v1808
      %v1810 = vrcp.pop %v1696
      %v1811 = vmul.f32 %v1696, %v1810
      %v1812 = vsub.f32 1.0, %v1811
      %v1813 = vmul.f32 %v1810, %v1812
      %v1814 = vadd.f32 %v1810, %v1813
      %vm1815 = vweird.f32 %v1696
      %vm1816 = vweird.f32 %v1810
      %vm1817 = vmor %vm1815, %vm1816
      %v1818 = vsel %vm1817, %v1810, %v1814
      %v1819 = vand.u32 2147483647, %v1696
      %vm1820 = vcmp.eq.f32.partialorder %v1819, 8.507059e+37
      %v1821 = vand.u32 %v1696, 2147483648
      %v1822 = vor.u32 1.1754944e-38, %v1821
      %v1823 = vsel %vm1820, %v1822, %v1818
      %v1824 = vmul.f32 1.0, %v1823
      %v1825 = vrcp.pop %v1697
      %v1826 = vmul.f32 %v1697, %v1825
      %v1827 = vsub.f32 1.0, %v1826
      %v1828 = vmul.f32 %v1825, %v1827
      %v1829 = vadd.f32 %v1825, %v1828
      %vm1830 = vweird.f32 %v1697
      %vm1831 = vweird.f32 %v1825
      %vm1832 = vmor %vm1830, %vm1831
      %v1833 = vsel %vm1832, %v1825, %v1829
      %v1834 = vand.u32 2147483647, %v1697
      %vm1835 = vcmp.eq.f32.partialorder %v1834, 8.507059e+37
      %v1836 = vand.u32 %v1697, 2147483648
      %v1837 = vor.u32 1.1754944e-38, %v1836
      %v1838 = vsel %vm1835, %v1837, %v1833
      %v1839 = vmul.f32 1.0, %v1838
      %v1840 = vrcp.pop %v1698
      %v1841 = vmul.f32 %v1698, %v1840
      %v1842 = vsub.f32 1.0, %v1841
      %v1843 = vmul.f32 %v1840, %v1842
      %v1844 = vadd.f32 %v1840, %v1843
      %vm1845 = vweird.f32 %v1698
      %vm1846 = vweird.f32 %v1840
      %vm1847 = vmor %vm1845, %vm1846
      %v1848 = vsel %vm1847, %v1840, %v1844
      %v1849 = vand.u32 2147483647, %v1698
      %vm1850 = vcmp.eq.f32.partialorder %v1849, 8.507059e+37
      %v1851 = vand.u32 %v1698, 2147483648
      %v1852 = vor.u32 1.1754944e-38, %v1851
      %v1853 = vsel %vm1850, %v1852, %v1848
      %v1854 = vmul.f32 1.0, %v1853
      %v1855 = vrcp.pop %v1699
      %v1856 = vmul.f32 %v1699, %v1855
      %v1857 = vsub.f32 1.0, %v1856
      %v1858 = vmul.f32 %v1855, %v1857
      %v1859 = vadd.f32 %v1855, %v1858
      %vm1860 = vweird.f32 %v1699
      %vm1861 = vweird.f32 %v1855
      %vm1862 = vmor %vm1860, %vm1861
      %v1863 = vsel %vm1862, %v1855, %v1859
      %v1864 = vand.u32 2147483647, %v1699
      %vm1865 = vcmp.eq.f32.partialorder %v1864, 8.507059e+37
      %v1866 = vand.u32 %v1699, 2147483648
      %v1867 = vor.u32 1.1754944e-38, %v1866
      %v1868 = vsel %vm1865, %v1867, %v1863
      %v1869 = vmul.f32 1.0, %v1868
      %v1870 = vrcp.pop %v1700
      %v1871 = vmul.f32 %v1700, %v1870
      %v1872 = vsub.f32 1.0, %v1871
      %v1873 = vmul.f32 %v1870, %v1872
      %v1874 = vadd.f32 %v1870, %v1873
      %vm1875 = vweird.f32 %v1700
      %vm1876 = vweird.f32 %v1870
      %vm1877 = vmor %vm1875, %vm1876
      %v1878 = vsel %vm1877, %v1870, %v1874
      %v1879 = vand.u32 2147483647, %v1700
      %vm1880 = vcmp.eq.f32.partialorder %v1879, 8.507059e+37
      %v1881 = vand.u32 %v1700, 2147483648
      %v1882 = vor.u32 1.1754944e-38, %v1881
      %v1883 = vsel %vm1880, %v1882, %v1878
      %v1884 = vmul.f32 1.0, %v1883
      %v1885 = vrcp.pop %v1701
      %v1886 = vmul.f32 %v1701, %v1885
      %v1887 = vsub.f32 1.0, %v1886
      %v1888 = vmul.f32 %v1885, %v1887
      %v1889 = vadd.f32 %v1885, %v1888
      %vm1890 = vweird.f32 %v1701
      %vm1891 = vweird.f32 %v1885
      %vm1892 = vmor %vm1890, %vm1891
      %v1893 = vsel %vm1892, %v1885, %v1889
      %v1894 = vand.u32 2147483647, %v1701
      %vm1895 = vcmp.eq.f32.partialorder %v1894, 8.507059e+37
      %v1896 = vand.u32 %v1701, 2147483648
      %v1897 = vor.u32 1.1754944e-38, %v1896
      %v1898 = vsel %vm1895, %v1897, %v1893
      %v1899 = vmul.f32 1.0, %v1898
      %v1900 = vrcp.pop %v1702
      %v1901 = vmul.f32 %v1702, %v1900
      %v1902 = vsub.f32 1.0, %v1901
      %v1903 = vmul.f32 %v1900, %v1902
      %v1904 = vadd.f32 %v1900, %v1903
      %vm1905 = vweird.f32 %v1702
      %vm1906 = vweird.f32 %v1900
      %vm1907 = vmor %vm1905, %vm1906
      %v1908 = vsel %vm1907, %v1900, %v1904
      %v1909 = vand.u32 2147483647, %v1702
      %vm1910 = vcmp.eq.f32.partialorder %v1909, 8.507059e+37
      %v1911 = vand.u32 %v1702, 2147483648
      %v1912 = vor.u32 1.1754944e-38, %v1911
      %v1913 = vsel %vm1910, %v1912, %v1908
      %v1914 = vmul.f32 1.0, %v1913
      %v1915 = vrcp.pop %v1703
      %v1916 = vmul.f32 %v1703, %v1915
      %v1917 = vsub.f32 1.0, %v1916
      %v1918 = vmul.f32 %v1915, %v1917
      %v1919 = vadd.f32 %v1915, %v1918
      %vm1920 = vweird.f32 %v1703
      %vm1921 = vweird.f32 %v1915
      %vm1922 = vmor %vm1920, %vm1921
      %v1923 = vsel %vm1922, %v1915, %v1919
      %v1924 = vand.u32 2147483647, %v1703
      %vm1925 = vcmp.eq.f32.partialorder %v1924, 8.507059e+37
      %v1926 = vand.u32 %v1703, 2147483648
      %v1927 = vor.u32 1.1754944e-38, %v1926
      %v1928 = vsel %vm1925, %v1927, %v1923
      %v1929 = vmul.f32 1.0, %v1928
      %v1930 = vrcp.pop %v1704
      %v1931 = vmul.f32 %v1704, %v1930
      %v1932 = vsub.f32 1.0, %v1931
      %v1933 = vmul.f32 %v1930, %v1932
      %v1934 = vadd.f32 %v1930, %v1933
      %vm1935 = vweird.f32 %v1704
      %vm1936 = vweird.f32 %v1930
      %vm1937 = vmor %vm1935, %vm1936
      %v1938 = vsel %vm1937, %v1930, %v1934
      %v1939 = vand.u32 2147483647, %v1704
      %vm1940 = vcmp.eq.f32.partialorder %v1939, 8.507059e+37
      %v1941 = vand.u32 %v1704, 2147483648
      %v1942 = vor.u32 1.1754944e-38, %v1941
      %v1943 = vsel %vm1940, %v1942, %v1938
      %v1944 = vmul.f32 1.0, %v1943
      %v1945 = vtanh.pop %v1594
      %v1946 = vtanh.pop %v1597
      %v1947 = vtanh.pop %v1600
      %v1948 = vtanh.pop %v1603
      %v1949 = vtanh.pop %v1606
      %v1950 = vtanh.pop %v1609
      %v1951 = vtanh.pop %v1612
      %v1952 = vtanh.pop %v1615
      %v1953 = vtanh.pop %v1618
      %v1954 = vtanh.pop %v1621
      %v1955 = vtanh.pop %v1624
      %v1956 = vtanh.pop %v1627
      %v1957 = vtanh.pop %v1630
      %v1958 = vtanh.pop %v1633
      %v1959 = vtanh.pop %v1636
      %v1960 = vtanh.pop %v1639
      %1977 = vrot.lane.b32.xlu0 %v1482, 96
      %v1978 = vpop.permute.xlu0 %1977
      %1979 = vrot.lane.b32.xlu0 %v1483, 96
      %v1980 = vpop.permute.xlu0 %1979
      %1981 = vrot.lane.b32.xlu0 %v1484, 96
      %v1982 = vpop.permute.xlu0 %1981
      %1983 = vrot.lane.b32.xlu0 %v1485, 96
      %v1984 = vpop.permute.xlu0 %1983
      %1985 = vrot.lane.b32.xlu0 %v1486, 96
      %v1986 = vpop.permute.xlu0 %1985
      %1987 = vrot.lane.b32.xlu0 %v1487, 96
      %v1988 = vpop.permute.xlu0 %1987
      %1989 = vrot.lane.b32.xlu0 %v1488, 96
      %v1990 = vpop.permute.xlu0 %1989
      %1991 = vrot.lane.b32.xlu0 %v1489, 96
      %v1992 = vpop.permute.xlu0 %1991
      %1993 = vrot.lane.b32.xlu0 %v1490, 96
      %v1994 = vpop.permute.xlu0 %1993
      %1995 = vrot.lane.b32.xlu0 %v1491, 96
      %v1996 = vpop.permute.xlu0 %1995
      %1997 = vrot.lane.b32.xlu0 %v1492, 96
      %v1998 = vpop.permute.xlu0 %1997
      %1999 = vrot.lane.b32.xlu0 %v1493, 96
      %v2000 = vpop.permute.xlu0 %1999
      %2001 = vrot.lane.b32.xlu0 %v1494, 96
      %v2002 = vpop.permute.xlu0 %2001
      %2003 = vrot.lane.b32.xlu0 %v1495, 96
      %v2004 = vpop.permute.xlu0 %2003
      %2005 = vrot.lane.b32.xlu0 %v1496, 96
      %v2006 = vpop.permute.xlu0 %2005
      %2007 = vrot.lane.b32.xlu0 %v1497, 96
      %v2008 = vpop.permute.xlu0 %2007
      %v2025 = vmul.f32 %v1719, %v1978
      %v2026 = vmul.f32 %v1734, %v1980
      %v2027 = vmul.f32 %v1749, %v1982
      %v2028 = vmul.f32 %v1764, %v1984
      %v2029 = vmul.f32 %v1779, %v1986
      %v2030 = vmul.f32 %v1794, %v1988
      %v2031 = vmul.f32 %v1809, %v1990
      %v2032 = vmul.f32 %v1824, %v1992
      %v2033 = vmul.f32 %v1839, %v1994
      %v2034 = vmul.f32 %v1854, %v1996
      %v2035 = vmul.f32 %v1869, %v1998
      %v2036 = vmul.f32 %v1884, %v2000
      %v2037 = vmul.f32 %v1899, %v2002
      %v2038 = vmul.f32 %v1914, %v2004
      %v2039 = vmul.f32 %v1929, %v2006
      %v2040 = vmul.f32 %v1944, %v2008
      %2057 = vrot.lane.b32.xlu0 %v1945, 64
      %v2058 = vpop.permute.xlu0 %2057
      %2059 = vrot.lane.b32.xlu0 %v1946, 64
      %v2060 = vpop.permute.xlu0 %2059
      %2061 = vrot.lane.b32.xlu0 %v1947, 64
      %v2062 = vpop.permute.xlu0 %2061
      %2063 = vrot.lane.b32.xlu0 %v1948, 64
      %v2064 = vpop.permute.xlu0 %2063
      %2065 = vrot.lane.b32.xlu0 %v1949, 64
      %v2066 = vpop.permute.xlu0 %2065
      %2067 = vrot.lane.b32.xlu0 %v1950, 64
      %v2068 = vpop.permute.xlu0 %2067
      %2069 = vrot.lane.b32.xlu0 %v1951, 64
      %v2070 = vpop.permute.xlu0 %2069
      %2071 = vrot.lane.b32.xlu0 %v1952, 64
      %v2072 = vpop.permute.xlu0 %2071
      %2073 = vrot.lane.b32.xlu0 %v1953, 64
      %v2074 = vpop.permute.xlu0 %2073
      %2075 = vrot.lane.b32.xlu0 %v1954, 64
      %v2076 = vpop.permute.xlu0 %2075
      %2077 = vrot.lane.b32.xlu0 %v1955, 64
      %v2078 = vpop.permute.xlu0 %2077
      %2079 = vrot.lane.b32.xlu0 %v1956, 64
      %v2080 = vpop.permute.xlu0 %2079
      %2081 = vrot.lane.b32.xlu0 %v1957, 64
      %v2082 = vpop.permute.xlu0 %2081
      %2083 = vrot.lane.b32.xlu0 %v1958, 64
      %v2084 = vpop.permute.xlu0 %2083
      %2085 = vrot.lane.b32.xlu0 %v1959, 64
      %v2086 = vpop.permute.xlu0 %2085
      %2087 = vrot.lane.b32.xlu0 %v1960, 64
      %v2088 = vpop.permute.xlu0 %2087
      %v2105 = vmul.f32 %v1719, %v2058
      %v2106 = vmul.f32 %v1734, %v2060
      %v2107 = vmul.f32 %v1749, %v2062
      %v2108 = vmul.f32 %v1764, %v2064
      %v2109 = vmul.f32 %v1779, %v2066
      %v2110 = vmul.f32 %v1794, %v2068
      %v2111 = vmul.f32 %v1809, %v2070
      %v2112 = vmul.f32 %v1824, %v2072
      %v2113 = vmul.f32 %v1839, %v2074
      %v2114 = vmul.f32 %v1854, %v2076
      %v2115 = vmul.f32 %v1869, %v2078
      %v2116 = vmul.f32 %v1884, %v2080
      %v2117 = vmul.f32 %v1899, %v2082
      %v2118 = vmul.f32 %v1914, %v2084
      %v2119 = vmul.f32 %v1929, %v2086
      %v2120 = vmul.f32 %v1944, %v2088
      %2137 = vrot.lane.b32.xlu0 %v2105, 32
      %v2138 = vpop.permute.xlu0 %2137
      %2139 = vrot.lane.b32.xlu0 %v2106, 32
      %v2140 = vpop.permute.xlu0 %2139
      %2141 = vrot.lane.b32.xlu0 %v2107, 32
      %v2142 = vpop.permute.xlu0 %2141
      %2143 = vrot.lane.b32.xlu0 %v2108, 32
      %v2144 = vpop.permute.xlu0 %2143
      %2145 = vrot.lane.b32.xlu0 %v2109, 32
      %v2146 = vpop.permute.xlu0 %2145
      %2147 = vrot.lane.b32.xlu0 %v2110, 32
      %v2148 = vpop.permute.xlu0 %2147
      %2149 = vrot.lane.b32.xlu0 %v2111, 32
      %v2150 = vpop.permute.xlu0 %2149
      %2151 = vrot.lane.b32.xlu0 %v2112, 32
      %v2152 = vpop.permute.xlu0 %2151
      %2153 = vrot.lane.b32.xlu0 %v2113, 32
      %v2154 = vpop.permute.xlu0 %2153
      %2155 = vrot.lane.b32.xlu0 %v2114, 32
      %v2156 = vpop.permute.xlu0 %2155
      %2157 = vrot.lane.b32.xlu0 %v2115, 32
      %v2158 = vpop.permute.xlu0 %2157
      %2159 = vrot.lane.b32.xlu0 %v2116, 32
      %v2160 = vpop.permute.xlu0 %2159
      %2161 = vrot.lane.b32.xlu0 %v2117, 32
      %v2162 = vpop.permute.xlu0 %2161
      %2163 = vrot.lane.b32.xlu0 %v2118, 32
      %v2164 = vpop.permute.xlu0 %2163
      %2165 = vrot.lane.b32.xlu0 %v2119, 32
      %v2166 = vpop.permute.xlu0 %2165
      %2167 = vrot.lane.b32.xlu0 %v2120, 32
      %v2168 = vpop.permute.xlu0 %2167
      %v2185 = vadd.f32 %v2025, %v2138
      %v2186 = vadd.f32 %v2026, %v2140
      %v2187 = vadd.f32 %v2027, %v2142
      %v2188 = vadd.f32 %v2028, %v2144
      %v2189 = vadd.f32 %v2029, %v2146
      %v2190 = vadd.f32 %v2030, %v2148
      %v2191 = vadd.f32 %v2031, %v2150
      %v2192 = vadd.f32 %v2032, %v2152
      %v2193 = vadd.f32 %v2033, %v2154
      %v2194 = vadd.f32 %v2034, %v2156
      %v2195 = vadd.f32 %v2035, %v2158
      %v2196 = vadd.f32 %v2036, %v2160
      %v2197 = vadd.f32 %v2037, %v2162
      %v2198 = vadd.f32 %v2038, %v2164
      %v2199 = vadd.f32 %v2039, %v2166
      %v2200 = vadd.f32 %v2040, %v2168
      %v2201 = vtanh.pop %v2185
      %v2202 = vtanh.pop %v2186
      %v2203 = vtanh.pop %v2187
      %v2204 = vtanh.pop %v2188
      %v2205 = vtanh.pop %v2189
      %v2206 = vtanh.pop %v2190
      %v2207 = vtanh.pop %v2191
      %v2208 = vtanh.pop %v2192
      %v2209 = vtanh.pop %v2193
      %v2210 = vtanh.pop %v2194
      %v2211 = vtanh.pop %v2195
      %v2212 = vtanh.pop %v2196
      %v2213 = vtanh.pop %v2197
      %v2214 = vtanh.pop %v2198
      %v2215 = vtanh.pop %v2199
      %v2216 = vtanh.pop %v2200
      %2233 = vrot.lane.b32.xlu0 %v2201, 64
      %v2234 = vpop.permute.xlu0 %2233
      %2235 = vrot.lane.b32.xlu0 %v2202, 64
      %v2236 = vpop.permute.xlu0 %2235
      %2237 = vrot.lane.b32.xlu0 %v2203, 64
      %v2238 = vpop.permute.xlu0 %2237
      %2239 = vrot.lane.b32.xlu0 %v2204, 64
      %v2240 = vpop.permute.xlu0 %2239
      %2241 = vrot.lane.b32.xlu0 %v2205, 64
      %v2242 = vpop.permute.xlu0 %2241
      %2243 = vrot.lane.b32.xlu0 %v2206, 64
      %v2244 = vpop.permute.xlu0 %2243
      %2245 = vrot.lane.b32.xlu0 %v2207, 64
      %v2246 = vpop.permute.xlu0 %2245
      %2247 = vrot.lane.b32.xlu0 %v2208, 64
      %v2248 = vpop.permute.xlu0 %2247
      %2249 = vrot.lane.b32.xlu0 %v2209, 64
      %v2250 = vpop.permute.xlu0 %2249
      %2251 = vrot.lane.b32.xlu0 %v2210, 64
      %v2252 = vpop.permute.xlu0 %2251
      %2253 = vrot.lane.b32.xlu0 %v2211, 64
      %v2254 = vpop.permute.xlu0 %2253
      %2255 = vrot.lane.b32.xlu0 %v2212, 64
      %v2256 = vpop.permute.xlu0 %2255
      %2257 = vrot.lane.b32.xlu0 %v2213, 64
      %v2258 = vpop.permute.xlu0 %2257
      %2259 = vrot.lane.b32.xlu0 %v2214, 64
      %v2260 = vpop.permute.xlu0 %2259
      %2261 = vrot.lane.b32.xlu0 %v2215, 64
      %v2262 = vpop.permute.xlu0 %2261
      %2263 = vrot.lane.b32.xlu0 %v2216, 64
      %v2264 = vpop.permute.xlu0 %2263
      %v2281 = vmul.f32 %v1719, %v2234
      %v2282 = vmul.f32 %v1734, %v2236
      %v2283 = vmul.f32 %v1749, %v2238
      %v2284 = vmul.f32 %v1764, %v2240
      %v2285 = vmul.f32 %v1779, %v2242
      %v2286 = vmul.f32 %v1794, %v2244
      %v2287 = vmul.f32 %v1809, %v2246
      %v2288 = vmul.f32 %v1824, %v2248
      %v2289 = vmul.f32 %v1839, %v2250
      %v2290 = vmul.f32 %v1854, %v2252
      %v2291 = vmul.f32 %v1869, %v2254
      %v2292 = vmul.f32 %v1884, %v2256
      %v2293 = vmul.f32 %v1899, %v2258
      %v2294 = vmul.f32 %v1914, %v2260
      %v2295 = vmul.f32 %v1929, %v2262
      %v2296 = vmul.f32 %v1944, %v2264
      %v2297 = vsel %vm569, 1, 0
      %v2298 = vsel %vm570, 1, 0
      %v2299 = vsel %vm571, 1, 0
      %v2300 = vsel %vm572, 1, 0
      %v2301 = vsel %vm573, 1, 0
      %v2302 = vsel %vm574, 1, 0
      %v2303 = vsel %vm575, 1, 0
      %v2304 = vsel %vm576, 1, 0
      %v2305 = vsel %vm577, 1, 0
      %v2306 = vsel %vm578, 1, 0
      %v2307 = vsel %vm579, 1, 0
      %v2308 = vsel %vm580, 1, 0
      %v2309 = vsel %vm581, 1, 0
      %v2310 = vsel %vm582, 1, 0
      %v2311 = vsel %vm583, 1, 0
      %v2312 = vsel %vm584, 1, 0
      %v2313 = vsel %vm585, 1, 0
      %v2314 = vsel %vm586, 1, 0
      %v2315 = vsel %vm587, 1, 0
      %v2316 = vsel %vm588, 1, 0
      %v2317 = vsel %vm589, 1, 0
      %v2318 = vsel %vm590, 1, 0
      %v2319 = vsel %vm591, 1, 0
      %v2320 = vsel %vm592, 1, 0
      %v2321 = vsel %vm593, 1, 0
      %v2322 = vsel %vm594, 1, 0
      %v2323 = vsel %vm595, 1, 0
      %v2324 = vsel %vm596, 1, 0
      %v2325 = vsel %vm597, 1, 0
      %v2326 = vsel %vm598, 1, 0
      %v2327 = vsel %vm599, 1, 0
      %v2328 = vsel %vm600, 1, 0
      %v2329 = vcvt.s32.f32 %v2297
      %v2330 = vcvt.s32.f32 %v2298
      %v2331 = vcvt.s32.f32 %v2299
      %v2332 = vcvt.s32.f32 %v2300
      %v2333 = vcvt.s32.f32 %v2301
      %v2334 = vcvt.s32.f32 %v2302
      %v2335 = vcvt.s32.f32 %v2303
      %v2336 = vcvt.s32.f32 %v2304
      %v2337 = vcvt.s32.f32 %v2305
      %v2338 = vcvt.s32.f32 %v2306
      %v2339 = vcvt.s32.f32 %v2307
      %v2340 = vcvt.s32.f32 %v2308
      %v2341 = vcvt.s32.f32 %v2309
      %v2342 = vcvt.s32.f32 %v2310
      %v2343 = vcvt.s32.f32 %v2311
      %v2344 = vcvt.s32.f32 %v2312
      %v2345 = vcvt.s32.f32 %v2313
      %v2346 = vcvt.s32.f32 %v2314
      %v2347 = vcvt.s32.f32 %v2315
      %v2348 = vcvt.s32.f32 %v2316
      %v2349 = vcvt.s32.f32 %v2317
      %v2350 = vcvt.s32.f32 %v2318
      %v2351 = vcvt.s32.f32 %v2319
      %v2352 = vcvt.s32.f32 %v2320
      %v2353 = vcvt.s32.f32 %v2321
      %v2354 = vcvt.s32.f32 %v2322
      %v2355 = vcvt.s32.f32 %v2323
      %v2356 = vcvt.s32.f32 %v2324
      %v2357 = vcvt.s32.f32 %v2325
      %v2358 = vcvt.s32.f32 %v2326
      %v2359 = vcvt.s32.f32 %v2327
      %v2360 = vcvt.s32.f32 %v2328
      %v2361 = vadd.f32 %v2329, %v2330
      %2362 = vadd.xlane.f32.xlu0 %v2361
      %v2363 = vpop.xlane.xlu0 %2362
      %v2364 = vadd.f32 %v2331, %v2332
      %2365 = vadd.xlane.f32.xlu0 %v2364
      %v2366 = vpop.xlane.xlu0 %2365
      %v2367 = vadd.f32 %v2333, %v2334
      %2368 = vadd.xlane.f32.xlu0 %v2367
      %v2369 = vpop.xlane.xlu0 %2368
      %v2370 = vadd.f32 %v2335, %v2336
      %2371 = vadd.xlane.f32.xlu0 %v2370
      %v2372 = vpop.xlane.xlu0 %2371
      %v2373 = vadd.f32 %v2337, %v2338
      %2374 = vadd.xlane.f32.xlu0 %v2373
      %v2375 = vpop.xlane.xlu0 %2374
      %v2376 = vadd.f32 %v2339, %v2340
      %2377 = vadd.xlane.f32.xlu0 %v2376
      %v2378 = vpop.xlane.xlu0 %2377
      %v2379 = vadd.f32 %v2341, %v2342
      %2380 = vadd.xlane.f32.xlu0 %v2379
      %v2381 = vpop.xlane.xlu0 %2380
      %v2382 = vadd.f32 %v2343, %v2344
      %2383 = vadd.xlane.f32.xlu0 %v2382
      %v2384 = vpop.xlane.xlu0 %2383
      %v2385 = vadd.f32 %v2345, %v2346
      %2386 = vadd.xlane.f32.xlu0 %v2385
      %v2387 = vpop.xlane.xlu0 %2386
      %v2388 = vadd.f32 %v2347, %v2348
      %2389 = vadd.xlane.f32.xlu0 %v2388
      %v2390 = vpop.xlane.xlu0 %2389
      %v2391 = vadd.f32 %v2349, %v2350
      %2392 = vadd.xlane.f32.xlu0 %v2391
      %v2393 = vpop.xlane.xlu0 %2392
      %v2394 = vadd.f32 %v2351, %v2352
      %2395 = vadd.xlane.f32.xlu0 %v2394
      %v2396 = vpop.xlane.xlu0 %2395
      %v2397 = vadd.f32 %v2353, %v2354
      %2398 = vadd.xlane.f32.xlu0 %v2397
      %v2399 = vpop.xlane.xlu0 %2398
      %v2400 = vadd.f32 %v2355, %v2356
      %2401 = vadd.xlane.f32.xlu0 %v2400
      %v2402 = vpop.xlane.xlu0 %2401
      %v2403 = vadd.f32 %v2357, %v2358
      %2404 = vadd.xlane.f32.xlu0 %v2403
      %v2405 = vpop.xlane.xlu0 %2404
      %v2406 = vadd.f32 %v2359, %v2360
      %2407 = vadd.xlane.f32.xlu0 %v2406
      %v2408 = vpop.xlane.xlu0 %2407
      %vm2409 = vcmp.gt.f32.partialorder %v2363, 0.0
      %vm2410 = vcmp.gt.f32.partialorder %v2366, 0.0
      %vm2411 = vcmp.gt.f32.partialorder %v2369, 0.0
      %vm2412 = vcmp.gt.f32.partialorder %v2372, 0.0
      %vm2413 = vcmp.gt.f32.partialorder %v2375, 0.0
      %vm2414 = vcmp.gt.f32.partialorder %v2378, 0.0
      %vm2415 = vcmp.gt.f32.partialorder %v2381, 0.0
      %vm2416 = vcmp.gt.f32.partialorder %v2384, 0.0
      %vm2417 = vcmp.gt.f32.partialorder %v2387, 0.0
      %vm2418 = vcmp.gt.f32.partialorder %v2390, 0.0
      %vm2419 = vcmp.gt.f32.partialorder %v2393, 0.0
      %vm2420 = vcmp.gt.f32.partialorder %v2396, 0.0
      %vm2421 = vcmp.gt.f32.partialorder %v2399, 0.0
      %vm2422 = vcmp.gt.f32.partialorder %v2402, 0.0
      %vm2423 = vcmp.gt.f32.partialorder %v2405, 0.0
      %vm2424 = vcmp.gt.f32.partialorder %v2408, 0.0
      %v2425 = vld [vmem:[%s461] sm:$0xff]
      %v2426 = vld [vmem:[%s461 + $0x8] sm:$0xff]
      %v2427 = vld [vmem:[%s461 + $0x10] sm:$0xff]
      %v2428 = vld [vmem:[%s461 + $0x18] sm:$0xff]
      %v2429 = vld [vmem:[%s461 + $0x20] sm:$0xff]
      %v2430 = vld [vmem:[%s461 + $0x28] sm:$0xff]
      %v2431 = vld [vmem:[%s461 + $0x30] sm:$0xff]
      %v2432 = vld [vmem:[%s461 + $0x38] sm:$0xff]
      %v2433 = vld [vmem:[%s461 + $0x40] sm:$0xff]
      %v2434 = vld [vmem:[%s461 + $0x48] sm:$0xff]
      %v2435 = vld [vmem:[%s461 + $0x50] sm:$0xff]
      %v2436 = vld [vmem:[%s461 + $0x58] sm:$0xff]
      %v2437 = vld [vmem:[%s461 + $0x60] sm:$0xff]
      %v2438 = vld [vmem:[%s461 + $0x68] sm:$0xff]
      %v2439 = vld [vmem:[%s461 + $0x70] sm:$0xff]
      %v2440 = vld [vmem:[%s461 + $0x78] sm:$0xff]
      %vm2441 = vcmp.gt.f32.partialorder %v2425, 0.5
      %vm2442 = vcmp.gt.f32.partialorder %v2426, 0.5
      %vm2443 = vcmp.gt.f32.partialorder %v2427, 0.5
      %vm2444 = vcmp.gt.f32.partialorder %v2428, 0.5
      %vm2445 = vcmp.gt.f32.partialorder %v2429, 0.5
      %vm2446 = vcmp.gt.f32.partialorder %v2430, 0.5
      %vm2447 = vcmp.gt.f32.partialorder %v2431, 0.5
      %vm2448 = vcmp.gt.f32.partialorder %v2432, 0.5
      %vm2449 = vcmp.gt.f32.partialorder %v2433, 0.5
      %vm2450 = vcmp.gt.f32.partialorder %v2434, 0.5
      %vm2451 = vcmp.gt.f32.partialorder %v2435, 0.5
      %vm2452 = vcmp.gt.f32.partialorder %v2436, 0.5
      %vm2453 = vcmp.gt.f32.partialorder %v2437, 0.5
      %vm2454 = vcmp.gt.f32.partialorder %v2438, 0.5
      %vm2455 = vcmp.gt.f32.partialorder %v2439, 0.5
      %vm2456 = vcmp.gt.f32.partialorder %v2440, 0.5
      %vm2457 = vmor %vm2409, %vm2441
      %vm2458 = vmor %vm2410, %vm2442
      %vm2459 = vmor %vm2411, %vm2443
      %vm2460 = vmor %vm2412, %vm2444
      %vm2461 = vmor %vm2413, %vm2445
      %vm2462 = vmor %vm2414, %vm2446
      %vm2463 = vmor %vm2415, %vm2447
      %vm2464 = vmor %vm2416, %vm2448
      %vm2465 = vmor %vm2417, %vm2449
      %vm2466 = vmor %vm2418, %vm2450
      %vm2467 = vmor %vm2419, %vm2451
      %vm2468 = vmor %vm2420, %vm2452
      %vm2469 = vmor %vm2421, %vm2453
      %vm2470 = vmor %vm2422, %vm2454
      %vm2471 = vmor %vm2423, %vm2455
      %vm2472 = vmor %vm2424, %vm2456
      %v2473 = vsel %vm2457, 1, 0
      %v2474 = vsel %vm2458, 1, 0
      %v2475 = vsel %vm2459, 1, 0
      %v2476 = vsel %vm2460, 1, 0
      %v2477 = vsel %vm2461, 1, 0
      %v2478 = vsel %vm2462, 1, 0
      %v2479 = vsel %vm2463, 1, 0
      %v2480 = vsel %vm2464, 1, 0
      %v2481 = vsel %vm2465, 1, 0
      %v2482 = vsel %vm2466, 1, 0
      %v2483 = vsel %vm2467, 1, 0
      %v2484 = vsel %vm2468, 1, 0
      %v2485 = vsel %vm2469, 1, 0
      %v2486 = vsel %vm2470, 1, 0
      %v2487 = vsel %vm2471, 1, 0
      %v2488 = vsel %vm2472, 1, 0
      %v2489 = vcvt.s32.f32 %v2473
      %v2490 = vcvt.s32.f32 %v2474
      %v2491 = vcvt.s32.f32 %v2475
      %v2492 = vcvt.s32.f32 %v2476
      %v2493 = vcvt.s32.f32 %v2477
      %v2494 = vcvt.s32.f32 %v2478
      %v2495 = vcvt.s32.f32 %v2479
      %v2496 = vcvt.s32.f32 %v2480
      %v2497 = vcvt.s32.f32 %v2481
      %v2498 = vcvt.s32.f32 %v2482
      %v2499 = vcvt.s32.f32 %v2483
      %v2500 = vcvt.s32.f32 %v2484
      %v2501 = vcvt.s32.f32 %v2485
      %v2502 = vcvt.s32.f32 %v2486
      %v2503 = vcvt.s32.f32 %v2487
      %v2504 = vcvt.s32.f32 %v2488
      %2506 = vset.pattern.permute.xlu0 0
      %2507 = vperm.xlu0 %2506, %v2489
      %v2508 = vpop.permute.xlu0 %2507
      %2511 = vset.pattern.permute.xlu0 0
      %2512 = vperm.xlu0 %2511, %v2490
      %v2513 = vpop.permute.xlu0 %2512
      %2516 = vset.pattern.permute.xlu0 0
      %2517 = vperm.xlu0 %2516, %v2491
      %v2518 = vpop.permute.xlu0 %2517
      %2521 = vset.pattern.permute.xlu0 0
      %2522 = vperm.xlu0 %2521, %v2492
      %v2523 = vpop.permute.xlu0 %2522
      %2526 = vset.pattern.permute.xlu0 0
      %2527 = vperm.xlu0 %2526, %v2493
      %v2528 = vpop.permute.xlu0 %2527
      %2531 = vset.pattern.permute.xlu0 0
      %2532 = vperm.xlu0 %2531, %v2494
      %v2533 = vpop.permute.xlu0 %2532
      %2536 = vset.pattern.permute.xlu0 0
      %2537 = vperm.xlu0 %2536, %v2495
      %v2538 = vpop.permute.xlu0 %2537
      %2541 = vset.pattern.permute.xlu0 0
      %2542 = vperm.xlu0 %2541, %v2496
      %v2543 = vpop.permute.xlu0 %2542
      %2546 = vset.pattern.permute.xlu0 0
      %2547 = vperm.xlu0 %2546, %v2497
      %v2548 = vpop.permute.xlu0 %2547
      %2551 = vset.pattern.permute.xlu0 0
      %2552 = vperm.xlu0 %2551, %v2498
      %v2553 = vpop.permute.xlu0 %2552
      %2556 = vset.pattern.permute.xlu0 0
      %2557 = vperm.xlu0 %2556, %v2499
      %v2558 = vpop.permute.xlu0 %2557
      %2561 = vset.pattern.permute.xlu0 0
      %2562 = vperm.xlu0 %2561, %v2500
      %v2563 = vpop.permute.xlu0 %2562
      %2566 = vset.pattern.permute.xlu0 0
      %2567 = vperm.xlu0 %2566, %v2501
      %v2568 = vpop.permute.xlu0 %2567
      %2571 = vset.pattern.permute.xlu0 0
      %2572 = vperm.xlu0 %2571, %v2502
      %v2573 = vpop.permute.xlu0 %2572
      %2576 = vset.pattern.permute.xlu0 0
      %2577 = vperm.xlu0 %2576, %v2503
      %v2578 = vpop.permute.xlu0 %2577
      %2581 = vset.pattern.permute.xlu0 0
      %2582 = vperm.xlu0 %2581, %v2504
      %v2583 = vpop.permute.xlu0 %2582
      %v2585 = vld [vmem:[%s473] sm:$0xff]
      %v2586 = vld [vmem:[%s473 + $0x8] sm:$0xff]
      %v2587 = vld [vmem:[%s473 + $0x10] sm:$0xff]
      %v2588 = vld [vmem:[%s473 + $0x18] sm:$0xff]
      %v2589 = vld [vmem:[%s473 + $0x20] sm:$0xff]
      %v2590 = vld [vmem:[%s473 + $0x28] sm:$0xff]
      %v2591 = vld [vmem:[%s473 + $0x30] sm:$0xff]
      %v2592 = vld [vmem:[%s473 + $0x38] sm:$0xff]
      %v2593 = vld [vmem:[%s473 + $0x40] sm:$0xff]
      %v2594 = vld [vmem:[%s473 + $0x48] sm:$0xff]
      %v2595 = vld [vmem:[%s473 + $0x50] sm:$0xff]
      %v2596 = vld [vmem:[%s473 + $0x58] sm:$0xff]
      %v2597 = vld [vmem:[%s473 + $0x60] sm:$0xff]
      %v2598 = vld [vmem:[%s473 + $0x68] sm:$0xff]
      %v2599 = vld [vmem:[%s473 + $0x70] sm:$0xff]
      %v2600 = vld [vmem:[%s473 + $0x78] sm:$0xff]
      %2617 = vrot.lane.b32.xlu0 %v2585, 96
      %v2618 = vpop.permute.xlu0 %2617
      %2619 = vrot.lane.b32.xlu0 %v2586, 96
      %v2620 = vpop.permute.xlu0 %2619
      %2621 = vrot.lane.b32.xlu0 %v2587, 96
      %v2622 = vpop.permute.xlu0 %2621
      %2623 = vrot.lane.b32.xlu0 %v2588, 96
      %v2624 = vpop.permute.xlu0 %2623
      %2625 = vrot.lane.b32.xlu0 %v2589, 96
      %v2626 = vpop.permute.xlu0 %2625
      %2627 = vrot.lane.b32.xlu0 %v2590, 96
      %v2628 = vpop.permute.xlu0 %2627
      %2629 = vrot.lane.b32.xlu0 %v2591, 96
      %v2630 = vpop.permute.xlu0 %2629
      %2631 = vrot.lane.b32.xlu0 %v2592, 96
      %v2632 = vpop.permute.xlu0 %2631
      %2633 = vrot.lane.b32.xlu0 %v2593, 96
      %v2634 = vpop.permute.xlu0 %2633
      %2635 = vrot.lane.b32.xlu0 %v2594, 96
      %v2636 = vpop.permute.xlu0 %2635
      %2637 = vrot.lane.b32.xlu0 %v2595, 96
      %v2638 = vpop.permute.xlu0 %2637
      %2639 = vrot.lane.b32.xlu0 %v2596, 96
      %v2640 = vpop.permute.xlu0 %2639
      %2641 = vrot.lane.b32.xlu0 %v2597, 96
      %v2642 = vpop.permute.xlu0 %2641
      %2643 = vrot.lane.b32.xlu0 %v2598, 96
      %v2644 = vpop.permute.xlu0 %2643
      %2645 = vrot.lane.b32.xlu0 %v2599, 96
      %v2646 = vpop.permute.xlu0 %2645
      %2647 = vrot.lane.b32.xlu0 %v2600, 96
      %v2648 = vpop.permute.xlu0 %2647
      %v2665 = vadd.f32 %v2281, %v2618
      %v2666 = vadd.f32 %v2282, %v2620
      %v2667 = vadd.f32 %v2283, %v2622
      %v2668 = vadd.f32 %v2284, %v2624
      %v2669 = vadd.f32 %v2285, %v2626
      %v2670 = vadd.f32 %v2286, %v2628
      %v2671 = vadd.f32 %v2287, %v2630
      %v2672 = vadd.f32 %v2288, %v2632
      %v2673 = vadd.f32 %v2289, %v2634
      %v2674 = vadd.f32 %v2290, %v2636
      %v2675 = vadd.f32 %v2291, %v2638
      %v2676 = vadd.f32 %v2292, %v2640
      %v2677 = vadd.f32 %v2293, %v2642
      %v2678 = vadd.f32 %v2294, %v2644
      %v2679 = vadd.f32 %v2295, %v2646
      %v2680 = vadd.f32 %v2296, %v2648
      %v2681 = vmul.f32 %v2508, %v2665
      %v2682 = vmul.f32 %v2513, %v2666
      %v2683 = vmul.f32 %v2518, %v2667
      %v2684 = vmul.f32 %v2523, %v2668
      %v2685 = vmul.f32 %v2528, %v2669
      %v2686 = vmul.f32 %v2533, %v2670
      %v2687 = vmul.f32 %v2538, %v2671
      %v2688 = vmul.f32 %v2543, %v2672
      %v2689 = vmul.f32 %v2548, %v2673
      %v2690 = vmul.f32 %v2553, %v2674
      %v2691 = vmul.f32 %v2558, %v2675
      %v2692 = vmul.f32 %v2563, %v2676
      %v2693 = vmul.f32 %v2568, %v2677
      %v2694 = vmul.f32 %v2573, %v2678
      %v2695 = vmul.f32 %v2578, %v2679
      %v2696 = vmul.f32 %v2583, %v2680
      %v2697 = vsub.f32 1.0, %v2508
      %v2698 = vsub.f32 1.0, %v2513
      %v2699 = vsub.f32 1.0, %v2518
      %v2700 = vsub.f32 1.0, %v2523
      %v2701 = vsub.f32 1.0, %v2528
      %v2702 = vsub.f32 1.0, %v2533
      %v2703 = vsub.f32 1.0, %v2538
      %v2704 = vsub.f32 1.0, %v2543
      %v2705 = vsub.f32 1.0, %v2548
      %v2706 = vsub.f32 1.0, %v2553
      %v2707 = vsub.f32 1.0, %v2558
      %v2708 = vsub.f32 1.0, %v2563
      %v2709 = vsub.f32 1.0, %v2568
      %v2710 = vsub.f32 1.0, %v2573
      %v2711 = vsub.f32 1.0, %v2578
      %v2712 = vsub.f32 1.0, %v2583
      %v2713 = vmul.f32 %v2697, %v1482
      %v2714 = vmul.f32 %v2698, %v1483
      %v2715 = vmul.f32 %v2699, %v1484
      %v2716 = vmul.f32 %v2700, %v1485
      %v2717 = vmul.f32 %v2701, %v1486
      %v2718 = vmul.f32 %v2702, %v1487
      %v2719 = vmul.f32 %v2703, %v1488
      %v2720 = vmul.f32 %v2704, %v1489
      %v2721 = vmul.f32 %v2705, %v1490
      %v2722 = vmul.f32 %v2706, %v1491
      %v2723 = vmul.f32 %v2707, %v1492
      %v2724 = vmul.f32 %v2708, %v1493
      %v2725 = vmul.f32 %v2709, %v1494
      %v2726 = vmul.f32 %v2710, %v1495
      %v2727 = vmul.f32 %v2711, %v1496
      %v2728 = vmul.f32 %v2712, %v1497
      %2745 = vrot.lane.b32.xlu0 %v2713, 96
      %v2746 = vpop.permute.xlu0 %2745
      %2747 = vrot.lane.b32.xlu0 %v2714, 96
      %v2748 = vpop.permute.xlu0 %2747
      %2749 = vrot.lane.b32.xlu0 %v2715, 96
      %v2750 = vpop.permute.xlu0 %2749
      %2751 = vrot.lane.b32.xlu0 %v2716, 96
      %v2752 = vpop.permute.xlu0 %2751
      %2753 = vrot.lane.b32.xlu0 %v2717, 96
      %v2754 = vpop.permute.xlu0 %2753
      %2755 = vrot.lane.b32.xlu0 %v2718, 96
      %v2756 = vpop.permute.xlu0 %2755
      %2757 = vrot.lane.b32.xlu0 %v2719, 96
      %v2758 = vpop.permute.xlu0 %2757
      %2759 = vrot.lane.b32.xlu0 %v2720, 96
      %v2760 = vpop.permute.xlu0 %2759
      %2761 = vrot.lane.b32.xlu0 %v2721, 96
      %v2762 = vpop.permute.xlu0 %2761
      %2763 = vrot.lane.b32.xlu0 %v2722, 96
      %v2764 = vpop.permute.xlu0 %2763
      %2765 = vrot.lane.b32.xlu0 %v2723, 96
      %v2766 = vpop.permute.xlu0 %2765
      %2767 = vrot.lane.b32.xlu0 %v2724, 96
      %v2768 = vpop.permute.xlu0 %2767
      %2769 = vrot.lane.b32.xlu0 %v2725, 96
      %v2770 = vpop.permute.xlu0 %2769
      %2771 = vrot.lane.b32.xlu0 %v2726, 96
      %v2772 = vpop.permute.xlu0 %2771
      %2773 = vrot.lane.b32.xlu0 %v2727, 96
      %v2774 = vpop.permute.xlu0 %2773
      %2775 = vrot.lane.b32.xlu0 %v2728, 96
      %v2776 = vpop.permute.xlu0 %2775
      %v2793 = vadd.f32 %v2681, %v2746
      %v2794 = vadd.f32 %v2682, %v2748
      %v2795 = vadd.f32 %v2683, %v2750
      %v2796 = vadd.f32 %v2684, %v2752
      %v2797 = vadd.f32 %v2685, %v2754
      %v2798 = vadd.f32 %v2686, %v2756
      %v2799 = vadd.f32 %v2687, %v2758
      %v2800 = vadd.f32 %v2688, %v2760
      %v2801 = vadd.f32 %v2689, %v2762
      %v2802 = vadd.f32 %v2690, %v2764
      %v2803 = vadd.f32 %v2691, %v2766
      %v2804 = vadd.f32 %v2692, %v2768
      %v2805 = vadd.f32 %v2693, %v2770
      %v2806 = vadd.f32 %v2694, %v2772
      %v2807 = vadd.f32 %v2695, %v2774
      %v2808 = vadd.f32 %v2696, %v2776
      %2825 = vrot.lane.b32.xlu0 %v2793, 32
      %v2826 = vpop.permute.xlu0 %2825
      %2827 = vrot.lane.b32.xlu0 %v2794, 32
      %v2828 = vpop.permute.xlu0 %2827
      %2829 = vrot.lane.b32.xlu0 %v2795, 32
      %v2830 = vpop.permute.xlu0 %2829
      %2831 = vrot.lane.b32.xlu0 %v2796, 32
      %v2832 = vpop.permute.xlu0 %2831
      %2833 = vrot.lane.b32.xlu0 %v2797, 32
      %v2834 = vpop.permute.xlu0 %2833
      %2835 = vrot.lane.b32.xlu0 %v2798, 32
      %v2836 = vpop.permute.xlu0 %2835
      %2837 = vrot.lane.b32.xlu0 %v2799, 32
      %v2838 = vpop.permute.xlu0 %2837
      %2839 = vrot.lane.b32.xlu0 %v2800, 32
      %v2840 = vpop.permute.xlu0 %2839
      %2841 = vrot.lane.b32.xlu0 %v2801, 32
      %v2842 = vpop.permute.xlu0 %2841
      %2843 = vrot.lane.b32.xlu0 %v2802, 32
      %v2844 = vpop.permute.xlu0 %2843
      %2845 = vrot.lane.b32.xlu0 %v2803, 32
      %v2846 = vpop.permute.xlu0 %2845
      %2847 = vrot.lane.b32.xlu0 %v2804, 32
      %v2848 = vpop.permute.xlu0 %2847
      %2849 = vrot.lane.b32.xlu0 %v2805, 32
      %v2850 = vpop.permute.xlu0 %2849
      %2851 = vrot.lane.b32.xlu0 %v2806, 32
      %v2852 = vpop.permute.xlu0 %2851
      %2853 = vrot.lane.b32.xlu0 %v2807, 32
      %v2854 = vpop.permute.xlu0 %2853
      %2855 = vrot.lane.b32.xlu0 %v2808, 32
      %v2856 = vpop.permute.xlu0 %2855
      %2889 = vrot.lane.b32.xlu0 %v2281, 64
      %v2890 = vpop.permute.xlu0 %2889
      %2891 = vrot.lane.b32.xlu0 %v2282, 64
      %v2892 = vpop.permute.xlu0 %2891
      %2893 = vrot.lane.b32.xlu0 %v2283, 64
      %v2894 = vpop.permute.xlu0 %2893
      %2895 = vrot.lane.b32.xlu0 %v2284, 64
      %v2896 = vpop.permute.xlu0 %2895
      %2897 = vrot.lane.b32.xlu0 %v2285, 64
      %v2898 = vpop.permute.xlu0 %2897
      %2899 = vrot.lane.b32.xlu0 %v2286, 64
      %v2900 = vpop.permute.xlu0 %2899
      %2901 = vrot.lane.b32.xlu0 %v2287, 64
      %v2902 = vpop.permute.xlu0 %2901
      %2903 = vrot.lane.b32.xlu0 %v2288, 64
      %v2904 = vpop.permute.xlu0 %2903
      %2905 = vrot.lane.b32.xlu0 %v2289, 64
      %v2906 = vpop.permute.xlu0 %2905
      %2907 = vrot.lane.b32.xlu0 %v2290, 64
      %v2908 = vpop.permute.xlu0 %2907
      %2909 = vrot.lane.b32.xlu0 %v2291, 64
      %v2910 = vpop.permute.xlu0 %2909
      %2911 = vrot.lane.b32.xlu0 %v2292, 64
      %v2912 = vpop.permute.xlu0 %2911
      %2913 = vrot.lane.b32.xlu0 %v2293, 64
      %v2914 = vpop.permute.xlu0 %2913
      %2915 = vrot.lane.b32.xlu0 %v2294, 64
      %v2916 = vpop.permute.xlu0 %2915
      %2917 = vrot.lane.b32.xlu0 %v2295, 64
      %v2918 = vpop.permute.xlu0 %2917
      %2919 = vrot.lane.b32.xlu0 %v2296, 64
      %v2920 = vpop.permute.xlu0 %2919
      %2953 = vrot.lane.b32.xlu0 %v2185, 32
      %v2954 = vpop.permute.xlu0 %2953
      %2955 = vrot.lane.b32.xlu0 %v2186, 32
      %v2956 = vpop.permute.xlu0 %2955
      %2957 = vrot.lane.b32.xlu0 %v2187, 32
      %v2958 = vpop.permute.xlu0 %2957
      %2959 = vrot.lane.b32.xlu0 %v2188, 32
      %v2960 = vpop.permute.xlu0 %2959
      %2961 = vrot.lane.b32.xlu0 %v2189, 32
      %v2962 = vpop.permute.xlu0 %2961
      %2963 = vrot.lane.b32.xlu0 %v2190, 32
      %v2964 = vpop.permute.xlu0 %2963
      %2965 = vrot.lane.b32.xlu0 %v2191, 32
      %v2966 = vpop.permute.xlu0 %2965
      %2967 = vrot.lane.b32.xlu0 %v2192, 32
      %v2968 = vpop.permute.xlu0 %2967
      %2969 = vrot.lane.b32.xlu0 %v2193, 32
      %v2970 = vpop.permute.xlu0 %2969
      %2971 = vrot.lane.b32.xlu0 %v2194, 32
      %v2972 = vpop.permute.xlu0 %2971
      %2973 = vrot.lane.b32.xlu0 %v2195, 32
      %v2974 = vpop.permute.xlu0 %2973
      %2975 = vrot.lane.b32.xlu0 %v2196, 32
      %v2976 = vpop.permute.xlu0 %2975
      %2977 = vrot.lane.b32.xlu0 %v2197, 32
      %v2978 = vpop.permute.xlu0 %2977
      %2979 = vrot.lane.b32.xlu0 %v2198, 32
      %v2980 = vpop.permute.xlu0 %2979
      %2981 = vrot.lane.b32.xlu0 %v2199, 32
      %v2982 = vpop.permute.xlu0 %2981
      %2983 = vrot.lane.b32.xlu0 %v2200, 32
      %v2984 = vpop.permute.xlu0 %2983
      %v3001 = vsel %vm1498, %v2826, %v2890
      %v3002 = vsel %vm1498, %v2828, %v2892
      %v3003 = vsel %vm1498, %v2830, %v2894
      %v3004 = vsel %vm1498, %v2832, %v2896
      %v3005 = vsel %vm1498, %v2834, %v2898
      %v3006 = vsel %vm1498, %v2836, %v2900
      %v3007 = vsel %vm1498, %v2838, %v2902
      %v3008 = vsel %vm1498, %v2840, %v2904
      %v3009 = vsel %vm1498, %v2842, %v2906
      %v3010 = vsel %vm1498, %v2844, %v2908
      %v3011 = vsel %vm1498, %v2846, %v2910
      %v3012 = vsel %vm1498, %v2848, %v2912
      %v3013 = vsel %vm1498, %v2850, %v2914
      %v3014 = vsel %vm1498, %v2852, %v2916
      %v3015 = vsel %vm1498, %v2854, %v2918
      %v3016 = vsel %vm1498, %v2856, %v2920
      %v3017 = vsel %vm1527, %v3001, %v2954
      %v3018 = vsel %vm1527, %v3002, %v2956
      %v3019 = vsel %vm1527, %v3003, %v2958
      %v3020 = vsel %vm1527, %v3004, %v2960
      %v3021 = vsel %vm1527, %v3005, %v2962
      %v3022 = vsel %vm1527, %v3006, %v2964
      %v3023 = vsel %vm1527, %v3007, %v2966
      %v3024 = vsel %vm1527, %v3008, %v2968
      %v3025 = vsel %vm1527, %v3009, %v2970
      %v3026 = vsel %vm1527, %v3010, %v2972
      %v3027 = vsel %vm1527, %v3011, %v2974
      %v3028 = vsel %vm1527, %v3012, %v2976
      %v3029 = vsel %vm1527, %v3013, %v2978
      %v3030 = vsel %vm1527, %v3014, %v2980
      %v3031 = vsel %vm1527, %v3015, %v2982
      %v3032 = vsel %vm1527, %v3016, %v2984
      %vm3033 = vcmask 785408
      %v3034 = vsel %vm3033, %v3017, %v2508
      %v3035 = vsel %vm3033, %v3018, %v2513
      %v3036 = vsel %vm3033, %v3019, %v2518
      %v3037 = vsel %vm3033, %v3020, %v2523
      %v3038 = vsel %vm3033, %v3021, %v2528
      %v3039 = vsel %vm3033, %v3022, %v2533
      %v3040 = vsel %vm3033, %v3023, %v2538
      %v3041 = vsel %vm3033, %v3024, %v2543
      %v3042 = vsel %vm3033, %v3025, %v2548
      %v3043 = vsel %vm3033, %v3026, %v2553
      %v3044 = vsel %vm3033, %v3027, %v2558
      %v3045 = vsel %vm3033, %v3028, %v2563
      %v3046 = vsel %vm3033, %v3029, %v2568
      %v3047 = vsel %vm3033, %v3030, %v2573
      %v3048 = vsel %vm3033, %v3031, %v2578
      %v3049 = vsel %vm3033, %v3032, %v2583
      %3050 = vst [vmem:[%s479] sm:$0xff] %v3034
      %3051 = vst [vmem:[%s479 + $0x8] sm:$0xff] %v3035
      %3052 = vst [vmem:[%s479 + $0x10] sm:$0xff] %v3036
      %3053 = vst [vmem:[%s479 + $0x18] sm:$0xff] %v3037
      %3054 = vst [vmem:[%s479 + $0x20] sm:$0xff] %v3038
      %3055 = vst [vmem:[%s479 + $0x28] sm:$0xff] %v3039
      %3056 = vst [vmem:[%s479 + $0x30] sm:$0xff] %v3040
      %3057 = vst [vmem:[%s479 + $0x38] sm:$0xff] %v3041
      %3058 = vst [vmem:[%s479 + $0x40] sm:$0xff] %v3042
      %3059 = vst [vmem:[%s479 + $0x48] sm:$0xff] %v3043
      %3060 = vst [vmem:[%s479 + $0x50] sm:$0xff] %v3044
      %3061 = vst [vmem:[%s479 + $0x58] sm:$0xff] %v3045
      %3062 = vst [vmem:[%s479 + $0x60] sm:$0xff] %v3046
      %3063 = vst [vmem:[%s479 + $0x68] sm:$0xff] %v3047
      %3064 = vst [vmem:[%s479 + $0x70] sm:$0xff] %v3048
      %3065 = vst [vmem:[%s479 + $0x78] sm:$0xff] %v3049
      %s3066 = smul.u32 16, %s22
      %p3067 = scmp.lt.s32.totalorder %s3066, 31
      %s3068 = scalar_select %p3067, %s3066, 31
      %s3069 = smul.addr %s3068, 8
      %s3070 = scalar_lea.vmem %s11, %s3069
      // Predicated region
      $region65: #{_lambda_.2} parent=63 // pred_check
        %p3071 = pneg %p296
      $region66: #{_lambda_.2} parent=63 // pred_check_branch
        %3073 = sbr.rel (%p3071) target = $region68
      $region67: #{_lambda_.2} parent=63 // pred_region
        %s3074 = smul.u32 16, %s22
      $region68: #{_lambda_.2} parent=63 // pred_fallthru
        _
    $region64: #{_lambda_.2} parent=5 // pred_fallthru
      _
    %p3075 = scmp.le.s32.totalorder 2, %s17
    // Predicated region
    $region69: #{_lambda_.2} parent=5 // pred_check
      %p3076 = pneg %p3075
    $region70: #{_lambda_.2} parent=5 // pred_check_branch
      %3078 = sbr.rel (%p3076) target = $region72
    $region71: #{_lambda_.2} parent=5 // pred_region
      %s3079 = ssub.s32 %s17, 2
      // Predicated region
      $region73: #{_lambda_.2} parent=71 // pred_check
        %p3080 = pneg %p302
      $region74: #{_lambda_.2} parent=71 // pred_check_branch
        %3082 = sbr.rel (%p3080) target = $region76
      $region75: #{_lambda_.2} parent=71 // pred_region
        %s3083 = smul.u32 16, %s23
        %p3084 = scmp.lt.s32.totalorder %s3083, 31
        %s3085 = scalar_select %p3084, %s3083, 31
        %s3086 = smul.addr %s3085, 8
        %s3087 = scalar_lea.vmem %s11, %s3086
      $region76: #{_lambda_.2} parent=71 // pred_fallthru
        _
    $region72: #{_lambda_.2} parent=5 // pred_fallthru
      _
  $region6: #{_lambda_.2} parent=0 // loop_footer
    %s21 = sadd.s32 1, %s17
  $region7: #{_lambda_.2} parent=0 // loop_footer_branch
    %16 = sbr.rel target = $region3
  $region8: #{_lambda_.2} parent=0 // loop_exit
    _

</llo_original>
